<compile_context>
chip_gen: v6e
topology: v6e:2x2x1
jax: 0.10.0
libtpu: 0.0.40
codegen_flags: <defaults>
</compile_context>

<pallas_src>
import numpy as np
import jax
import jax.numpy as jnp
from jax import lax
from jax.experimental import pallas as pl
from jax.experimental.pallas import tpu as pltpu

HIDDEN = 768
EPS = 1e-12
_INV_SQRT2 = float(1.0 / np.sqrt(2.0))


def _transform_kernel(x_ref, w_ref, b_ref, g_ref, beta_ref, o_ref):
    # x_ref: (tm, H) native dtype; w_ref: (H, H) native dtype, (in, out) layout.
    # MXU matmul with f32 accumulation; no operand upcast (keeps the fast bf16 path).
    h = jnp.dot(x_ref[...], w_ref[...], preferred_element_type=jnp.float32)
    h = h + b_ref[...].astype(jnp.float32)

    # Exact GELU (erf formulation, matches nn.GELU() default) -- erf rides the EUP slot.
    h = 0.5 * h * (1.0 + lax.erf(h * _INV_SQRT2))

    # LayerNorm over the last dim, eps=1e-12. Two-pass variance (numerically safe form).
    mean = jnp.mean(h, axis=-1, keepdims=True)
    centered = h - mean
    var = jnp.mean(centered * centered, axis=-1, keepdims=True)
    out = centered * lax.rsqrt(var + EPS)
    out = out * g_ref[...].astype(jnp.float32) + beta_ref[...].astype(jnp.float32)

    o_ref[...] = out.astype(o_ref.dtype)


def _round_up(v, m):
    return (v + m - 1) // m * m


def _choose_tile(n, tm_max):
    """Large row tile to fill the MXU, but keep >=2 grid steps when rows allow
    (so both v7x TensorCores get work under the 'parallel' grid axis)."""
    if n >= 2 * tm_max:
        return tm_max
    half = _round_up((n + 1) // 2, 8)   # sublane-aligned
    return max(8, min(tm_max, half))


def bert_prediction_head_transform(x, w_t, bias, gamma, beta, *, tm=256):
    """y = LayerNorm(GELU(x @ w_t + bias)).

    x:     (..., 768), f32 or bf16.
    w_t:   (768, 768) = torch weight transposed to (in, out).
    bias / gamma / beta: (768,).
    """
    orig_shape = x.shape
    x2d = x.reshape(-1, HIDDEN)
    n = x2d.shape[0]

    tile = _choose_tile(n, tm)
    n_pad = _round_up(n, tile)
    if n_pad != n:
        x2d = jnp.pad(x2d, ((0, n_pad - n), (0, 0)))
    grid = n_pad // tile

    bias2 = bias.reshape(1, HIDDEN)
    gamma2 = gamma.reshape(1, HIDDEN)
    beta2 = beta.reshape(1, HIDDEN)

    itemsize = jnp.dtype(x.dtype).itemsize
    cost = pl.CostEstimate(
        flops=2 * n_pad * HIDDEN * HIDDEN + 10 * n_pad * HIDDEN,
        transcendentals=n_pad * HIDDEN + n_pad,
        bytes_accessed=(2 * n_pad * HIDDEN + HIDDEN * HIDDEN + 3 * HIDDEN) * itemsize,
    )

    out = pl.pallas_call(
        _transform_kernel,
        out_shape=jax.ShapeDtypeStruct((n_pad, HIDDEN), x.dtype),
        grid_spec=pltpu.PrefetchScalarGridSpec(
            num_scalar_prefetch=0,
            grid=(grid,),
            in_specs=[
                pl.BlockSpec((tile, HIDDEN), lambda i: (i, 0)),       # x rows (streamed)
                pl.BlockSpec((HIDDEN, HIDDEN), lambda i: (0, 0)),     # weight (index-invariant: resident)
                pl.BlockSpec((1, HIDDEN), lambda i: (0, 0)),          # bias
                pl.BlockSpec((1, HIDDEN), lambda i: (0, 0)),          # LN gamma
                pl.BlockSpec((1, HIDDEN), lambda i: (0, 0)),          # LN beta
            ],
            out_specs=pl.BlockSpec((tile, HIDDEN), lambda i: (i, 0)),
        ),
        compiler_params=pltpu.CompilerParams(
            dimension_semantics=("parallel",)),
        cost_estimate=cost,
    )(x2d, w_t, bias2, gamma2, beta2)

    if n_pad != n:
        out = out[:n]
    return out.reshape(orig_shape)


def _reference(x2d, w_t, bias, gamma, beta):
    h = jnp.dot(x2d, w_t, preferred_element_type=jnp.float32) + bias
    h = 0.5 * h * (1.0 + lax.erf(h * _INV_SQRT2))
    mean = jnp.mean(h, axis=-1, keepdims=True)
    centered = h - mean
    var = jnp.mean(centered * centered, axis=-1, keepdims=True)
    return centered * lax.rsqrt(var + EPS) * gamma + beta


if __name__ == "__main__":
    key = jax.random.PRNGKey(0)
    k_x, k_w, k_b, k_g, k_beta, k_x2 = jax.random.split(key, 6)

    # Small test shapes consistent with the module (hidden dim must be 768).
    batch, seq = 2, 8
    x = jax.random.normal(k_x, (batch, seq, HIDDEN), dtype=jnp.float32)

    # Synthetic deterministic parameters: nn.Linear(768, 768), LayerNorm(768).
    w_torch = jax.random.normal(k_w, (HIDDEN, HIDDEN), dtype=jnp.float32) * 0.02  # (out, in)
    bias = jax.random.normal(k_b, (HIDDEN,), dtype=jnp.float32) * 0.02
    gamma = 1.0 + 0.1 * jax.random.normal(k_g, (HIDDEN,), dtype=jnp.float32)
    beta = 0.1 * jax.random.normal(k_beta, (HIDDEN,), dtype=jnp.float32)

    # Make x / W bf16-exact so the (bf16-operand) MXU path matches the f32 reference
    # up to accumulation order -- keeps the tolerance tight and meaningful.
    x = x.astype(jnp.bfloat16).astype(jnp.float32)
    w_t = w_torch.T.astype(jnp.bfloat16).astype(jnp.float32)  # kernel consumes (in, out)

    # Case 1: even row count (2*8 = 16 rows).
    out = bert_prediction_head_transform(x, w_t, bias, gamma, beta)
    out = jax.block_until_ready(out)
    ref = _reference(x.reshape(-1, HIDDEN), w_t, bias, gamma, beta).reshape(x.shape)
    np.testing.assert_allclose(np.asarray(out), np.asarray(ref), rtol=1e-3, atol=1e-3)

    # Case 2: ragged row count (3*5 = 15 rows) to exercise the padding path.
    x_ragged = jax.random.normal(k_x2, (3, 5, HIDDEN), dtype=jnp.float32)
    x_ragged = x_ragged.astype(jnp.bfloat16).astype(jnp.float32)
    out2 = bert_prediction_head_transform(x_ragged, w_t, bias, gamma, beta)
    out2 = jax.block_until_ready(out2)
    ref2 = _reference(x_ragged.reshape(-1, HIDDEN), w_t, bias, gamma, beta).reshape(x_ragged.shape)
    np.testing.assert_allclose(np.asarray(out2), np.asarray(ref2), rtol=1e-3, atol=1e-3)

    print("KERNEL_OK")
</pallas_src>

<mosaic_0001>
module attributes {stable_mosaic.version = 11 : i64} {
  func.func @_transform_kernel(%arg0: i32, %arg1: memref<8x768xf32, #tpu.memory_space<vmem>>, %arg2: memref<768x768xf32, #tpu.memory_space<vmem>>, %arg3: memref<1x768xf32, #tpu.memory_space<vmem>>, %arg4: memref<1x768xf32, #tpu.memory_space<vmem>>, %arg5: memref<1x768xf32, #tpu.memory_space<vmem>>, %arg6: memref<8x768xf32, #tpu.memory_space<vmem>>) attributes {dimension_semantics = [#tpu.dimension_semantics<parallel>], iteration_bounds = array<i64: 2>, scalar_prefetch = 0 : i64, scratch_operands = 0 : i64, tpu.core_type = #tpu.core_type<tc>, window_params = [{transform_indices = @transform_0, window_bounds = array<i64: 8, 768>}, {pipeline_mode = #tpu.pipeline_mode<synchronous>, transform_indices = @transform_1, window_bounds = array<i64: 768, 768>}, {pipeline_mode = #tpu.pipeline_mode<synchronous>, transform_indices = @transform_2, window_bounds = array<i64: 1, 768>}, {pipeline_mode = #tpu.pipeline_mode<synchronous>, transform_indices = @transform_3, window_bounds = array<i64: 1, 768>}, {pipeline_mode = #tpu.pipeline_mode<synchronous>, transform_indices = @transform_4, window_bounds = array<i64: 1, 768>}, {transform_indices = @transform_5, window_bounds = array<i64: 8, 768>}]} {
    %c0 = arith.constant 0 : index
    %c0_0 = arith.constant 0 : index
    %0 = vector.load %arg1[%c0, %c0_0] : memref<8x768xf32, #tpu.memory_space<vmem>>, vector<8x768xf32>
    %c0_1 = arith.constant 0 : index
    %c0_2 = arith.constant 0 : index
    %1 = vector.load %arg2[%c0_1, %c0_2] : memref<768x768xf32, #tpu.memory_space<vmem>>, vector<768x768xf32>
    %cst = arith.constant dense<0.000000e+00> : vector<8x768xf32>
    %2 = tpu.matmul %0, %1, %cst {dimension_numbers = #tpu.dot_dimension_numbers<[1], [0], [0], [1], [0, 0, 1, 1], [], []>} : vector<8x768xf32>, vector<768x768xf32>, vector<8x768xf32> -> vector<8x768xf32>
    %c0_3 = arith.constant 0 : index
    %c0_4 = arith.constant 0 : index
    %3 = vector.load %arg3[%c0_3, %c0_4] : memref<1x768xf32, #tpu.memory_space<vmem>>, vector<1x768xf32>
    %4 = vector.broadcast %3 : vector<1x768xf32> to vector<8x768xf32>
    %5 = arith.addf %2, %4 : vector<8x768xf32>
    %cst_5 = arith.constant 5.000000e-01 : f32
    %6 = vector.broadcast %cst_5 : f32 to vector<8x768xf32>
    %7 = arith.mulf %6, %5 : vector<8x768xf32>
    %cst_6 = arith.constant 0.707106769 : f32
    %8 = vector.broadcast %cst_6 : f32 to vector<8x768xf32>
    %9 = arith.mulf %5, %8 : vector<8x768xf32>
    %10 = math.erf %9 : vector<8x768xf32>
    %cst_7 = arith.constant 1.000000e+00 : f32
    %11 = vector.broadcast %cst_7 : f32 to vector<8x768xf32>
    %12 = arith.addf %11, %10 : vector<8x768xf32>
    %13 = arith.mulf %7, %12 : vector<8x768xf32>
    %cst_8 = arith.constant dense<0.000000e+00> : vector<8xf32>
    %14 = vector.multi_reduction <add>, %13, %cst_8 [1] : vector<8x768xf32> to vector<8xf32>
    %15 = vector.shape_cast %14 : vector<8xf32> to vector<8x1xf32>
    %cst_9 = arith.constant 7.680000e+02 : f32
    %16 = vector.broadcast %cst_9 : f32 to vector<8x1xf32>
    %17 = arith.divf %15, %16 : vector<8x1xf32>
    %18 = vector.broadcast %17 : vector<8x1xf32> to vector<8x768xf32>
    %19 = arith.subf %13, %18 : vector<8x768xf32>
    %20 = arith.mulf %19, %19 : vector<8x768xf32>
    %cst_10 = arith.constant dense<0.000000e+00> : vector<8xf32>
    %21 = vector.multi_reduction <add>, %20, %cst_10 [1] : vector<8x768xf32> to vector<8xf32>
    %22 = vector.shape_cast %21 : vector<8xf32> to vector<8x1xf32>
    %cst_11 = arith.constant 7.680000e+02 : f32
    %23 = vector.broadcast %cst_11 : f32 to vector<8x1xf32>
    %24 = arith.divf %22, %23 : vector<8x1xf32>
    %cst_12 = arith.constant 9.99999996E-13 : f32
    %25 = vector.broadcast %cst_12 : f32 to vector<8x1xf32>
    %26 = arith.addf %24, %25 : vector<8x1xf32>
    %27 = math.rsqrt %26 : vector<8x1xf32>
    %28 = vector.broadcast %27 : vector<8x1xf32> to vector<8x768xf32>
    %29 = arith.mulf %19, %28 : vector<8x768xf32>
    %c0_13 = arith.constant 0 : index
    %c0_14 = arith.constant 0 : index
    %30 = vector.load %arg4[%c0_13, %c0_14] : memref<1x768xf32, #tpu.memory_space<vmem>>, vector<1x768xf32>
    %31 = vector.broadcast %30 : vector<1x768xf32> to vector<8x768xf32>
    %32 = arith.mulf %29, %31 : vector<8x768xf32>
    %c0_15 = arith.constant 0 : index
    %c0_16 = arith.constant 0 : index
    %33 = vector.load %arg5[%c0_15, %c0_16] : memref<1x768xf32, #tpu.memory_space<vmem>>, vector<1x768xf32>
    %34 = vector.broadcast %33 : vector<1x768xf32> to vector<8x768xf32>
    %35 = arith.addf %32, %34 : vector<8x768xf32>
    %c0_17 = arith.constant 0 : index
    %c0_18 = arith.constant 0 : index
    %36 = vector.load %arg6[%c0_17, %c0_18] : memref<8x768xf32, #tpu.memory_space<vmem>>, vector<8x768xf32>
    tpu.vector_store %arg6[%c0_17, %c0_18], %35 {strides = array<i32>} : memref<8x768xf32, #tpu.memory_space<vmem>>, vector<8x768xf32>,
    return
  }
  func.func @transform_0(%arg0: i32) -> (i32, i32) {
    %c0_i32 = arith.constant 0 : i32
    %c0_i32_0 = arith.constant 0 : i32
    return %arg0, %c0_i32 : i32, i32
  }
  func.func @transform_1(%arg0: i32) -> (i32, i32) {
    %c0_i32 = arith.constant 0 : i32
    %c0_i32_0 = arith.constant 0 : i32
    %c0_i32_1 = arith.constant 0 : i32
    return %c0_i32, %c0_i32_0 : i32, i32
  }
  func.func @transform_2(%arg0: i32) -> (i32, i32) {
    %c0_i32 = arith.constant 0 : i32
    %c0_i32_0 = arith.constant 0 : i32
    %c0_i32_1 = arith.constant 0 : i32
    return %c0_i32, %c0_i32_0 : i32, i32
  }
  func.func @transform_3(%arg0: i32) -> (i32, i32) {
    %c0_i32 = arith.constant 0 : i32
    %c0_i32_0 = arith.constant 0 : i32
    %c0_i32_1 = arith.constant 0 : i32
    return %c0_i32, %c0_i32_0 : i32, i32
  }
  func.func @transform_4(%arg0: i32) -> (i32, i32) {
    %c0_i32 = arith.constant 0 : i32
    %c0_i32_0 = arith.constant 0 : i32
    %c0_i32_1 = arith.constant 0 : i32
    return %c0_i32, %c0_i32_0 : i32, i32
  }
  func.func @transform_5(%arg0: i32) -> (i32, i32) {
    %c0_i32 = arith.constant 0 : i32
    %c0_i32_0 = arith.constant 0 : i32
    return %arg0, %c0_i32 : i32, i32
  }
}

</mosaic_0001>

<llo_original>
// kernel: tpu_custom_call.1
$region0: #{tpu_custom_call.1}
  #allocation0 [shape = 'u32[]', space=smem, size = 0x4, offset = 0x4, fixed_abs, tag = 'smem constant byte address 0x4 - core index']
  #allocation1 [shape = 'u32[144,128]{1,0:T(1,128)}', space=vmem, size = 0x12000, scoped, tag = 'internal scratch']
  %s0 = inlined_call_operand.hbm [shape: f32[16,768], index: 0, kind: input, shape index: {}]
  %s1 = inlined_call_operand.hbm [shape: f32[768,768], index: 1, kind: input, shape index: {}]
  %s2 = inlined_call_operand.hbm [shape: f32[1,768], index: 2, kind: input, shape index: {}]
  %s3 = inlined_call_operand.hbm [shape: f32[1,768], index: 3, kind: input, shape index: {}]
  %s4 = inlined_call_operand.hbm [shape: f32[1,768], index: 4, kind: input, shape index: {}]
  %s5 = inlined_call_operand.hbm [shape: f32[16,768], index: 5, kind: output, shape index: {}]
  %s6 = sld [smem:[#allocation0]]
  $region73: #{tpu_custom_call.1} parent=0
    _
  %s8 = ssub.s32 1, %s6
  %s9 = scalar_select 0, %s8, %s6
  $region1: #{tpu_custom_call.1} parent=0
    #allocation2 [shape = 'u8[49152]{0}', space=vmem, size = 0xc000, scoped, tag = 'input window, operand 0']
    #allocation3 [shape = 's32[2]{0}', space=sflag, size = 0x8, scoped, tag = 'scoped memory for tpu_custom_call.1']
    #allocation4 [shape = 's32[2]{0}', space=sflag, size = 0x8, scoped, tag = 'scoped memory for tpu_custom_call.1']
    #allocation5 [shape = 'u8[2359296]{0}', space=vmem, size = 0x240000, scoped, tag = 'input window, operand 1, single buffered']
    #allocation6 [shape = 's32[1]{0}', space=sflag, size = 0x4, scoped, tag = 'scoped memory for tpu_custom_call.1']
    #allocation7 [shape = 'u8[3072]{0}', space=vmem, size = 0xc00, scoped, tag = 'input window, operand 2, single buffered']
    #allocation8 [shape = 'u8[3072]{0}', space=vmem, size = 0xc00, scoped, tag = 'input window, operand 3, single buffered']
    #allocation9 [shape = 's32[1]{0}', space=sflag, size = 0x4, scoped, tag = 'scoped memory for tpu_custom_call.1']
    #allocation10 [shape = 'u8[3072]{0}', space=vmem, size = 0xc00, scoped, tag = 'input window, operand 4, single buffered']
    #allocation11 [shape = 'u8[49152]{0}', space=vmem, size = 0xc000, scoped, tag = 'output window, operand 0']
    %10 = vsyncpa [#allocation3], 0
    %s11 = scalar_lea.sflag [#allocation3], 1
    %12 = vsyncpa %s11, 0
    %13 = vsyncpa [#allocation6], 0
    %14 = vsyncpa [#allocation9], 0
    %15 = vsyncpa [#allocation4], 0
    %s16 = scalar_lea.sflag [#allocation4], 1
    %17 = vsyncpa %s16, 0
    loop: start=0, step=1, limit=4
    $region2: #{tpu_custom_call.1} parent=1 // loop_pre_header
      _
    $region3: #{tpu_custom_call.1} parent=1 // loop_header
      %s19 = sphi 0, %s23
      %p20 = scmp.ge.s32.totalorder %s19, 4
      %s29 = sphi 0, %s31
      %s32 = sphi 0, %s29
      %s33 = sphi 0, %s32
      %s49 = sphi 0, %s33
      %s53 = sphi 0, %s53
      %s55 = sphi 0, %s53
      %s56 = sphi 0, %s55
      %s70 = sphi 0, %s56
      %s74 = sphi 0, %s74
      %s76 = sphi 0, %s74
      %s77 = sphi 0, %s76
      %s91 = sphi 0, %s77
      %s95 = sphi 0, %s95
      %s97 = sphi 0, %s95
      %s98 = sphi 0, %s97
      %s112 = sphi 0, %s98
      %s116 = sphi 0, %s116
      %s118 = sphi 0, %s116
      %s119 = sphi 0, %s118
      %s133 = sphi 0, %s119
      %s139 = sphi 0, %s141
      %s142 = sphi 0, %s139
      %s143 = sphi 0, %s142
      %s159 = sphi 0, %s143
    $region4: #{tpu_custom_call.1} parent=1 // loop_header_branch
      %22 = sbr.rel (%p20) target = $region8
    $region5: #{tpu_custom_call.1} parent=1 // loop_body
      %s24 = ssub.s32 %s19, 1
      %s25 = ssub.s32 %s19, 2
      %s26 = sadd.s32 %s19, 1
      %s27 = ssub.s32 %s19, %s26
      %p28 = scmp.eq.s32.totalorder %s27, 0
      %s30 = sadd.s32 %s29, 1
      %s31 = scalar_select %p28, %s29, %s30
      %p34 = pneg %p28
      %p35 = scmp.eq.s32.totalorder %s19, 1
      %p36 = por %p34, %p35
      %p37 = scmp.ne.s32.totalorder %s29, %s32
      %p38 = scmp.eq.s32.totalorder %s19, 0
      %p39 = por %p37, %p38
      %p40 = scmp.ne.s32.totalorder %s29, %s32
      %p41 = scmp.eq.s32.totalorder %s24, 1
      %p42 = por %p40, %p41
      %p43 = scmp.ne.s32.totalorder %s32, %s33
      %p44 = scmp.eq.s32.totalorder %s24, 0
      %p45 = por %p43, %p44
      %p46 = scmp.ne.s32.totalorder %s32, %s33
      %p47 = scmp.eq.s32.totalorder %s25, 1
      %p48 = por %p46, %p47
      %p50 = scmp.ne.s32.totalorder %s33, %s49
      %p51 = scmp.eq.s32.totalorder %s25, 0
      %p52 = por %p50, %p51
      %s54 = sadd.s32 %s53, 1
      %p57 = scmp.eq.s32.totalorder %s19, 1
      %p58 = scmp.ne.s32.totalorder %s53, %s55
      %p59 = scmp.eq.s32.totalorder %s19, 0
      %p60 = por %p58, %p59
      %p61 = scmp.ne.s32.totalorder %s53, %s55
      %p62 = scmp.eq.s32.totalorder %s24, 1
      %p63 = por %p61, %p62
      %p64 = scmp.ne.s32.totalorder %s55, %s56
      %p65 = scmp.eq.s32.totalorder %s24, 0
      %p66 = por %p64, %p65
      %p67 = scmp.ne.s32.totalorder %s55, %s56
      %p68 = scmp.eq.s32.totalorder %s25, 1
      %p69 = por %p67, %p68
      %p71 = scmp.ne.s32.totalorder %s56, %s70
      %p72 = scmp.eq.s32.totalorder %s25, 0
      %p73 = por %p71, %p72
      %s75 = sadd.s32 %s74, 1
      %p78 = scmp.eq.s32.totalorder %s19, 1
      %p79 = scmp.ne.s32.totalorder %s74, %s76
      %p80 = scmp.eq.s32.totalorder %s19, 0
      %p81 = por %p79, %p80
      %p82 = scmp.ne.s32.totalorder %s74, %s76
      %p83 = scmp.eq.s32.totalorder %s24, 1
      %p84 = por %p82, %p83
      %p85 = scmp.ne.s32.totalorder %s76, %s77
      %p86 = scmp.eq.s32.totalorder %s24, 0
      %p87 = por %p85, %p86
      %p88 = scmp.ne.s32.totalorder %s76, %s77
      %p89 = scmp.eq.s32.totalorder %s25, 1
      %p90 = por %p88, %p89
      %p92 = scmp.ne.s32.totalorder %s77, %s91
      %p93 = scmp.eq.s32.totalorder %s25, 0
      %p94 = por %p92, %p93
      %s96 = sadd.s32 %s95, 1
      %p99 = scmp.eq.s32.totalorder %s19, 1
      %p100 = scmp.ne.s32.totalorder %s95, %s97
      %p101 = scmp.eq.s32.totalorder %s19, 0
      %p102 = por %p100, %p101
      %p103 = scmp.ne.s32.totalorder %s95, %s97
      %p104 = scmp.eq.s32.totalorder %s24, 1
      %p105 = por %p103, %p104
      %p106 = scmp.ne.s32.totalorder %s97, %s98
      %p107 = scmp.eq.s32.totalorder %s24, 0
      %p108 = por %p106, %p107
      %p109 = scmp.ne.s32.totalorder %s97, %s98
      %p110 = scmp.eq.s32.totalorder %s25, 1
      %p111 = por %p109, %p110
      %p113 = scmp.ne.s32.totalorder %s98, %s112
      %p114 = scmp.eq.s32.totalorder %s25, 0
      %p115 = por %p113, %p114
      %s117 = sadd.s32 %s116, 1
      %p120 = scmp.eq.s32.totalorder %s19, 1
      %p121 = scmp.ne.s32.totalorder %s116, %s118
      %p122 = scmp.eq.s32.totalorder %s19, 0
      %p123 = por %p121, %p122
      %p124 = scmp.ne.s32.totalorder %s116, %s118
      %p125 = scmp.eq.s32.totalorder %s24, 1
      %p126 = por %p124, %p125
      %p127 = scmp.ne.s32.totalorder %s118, %s119
      %p128 = scmp.eq.s32.totalorder %s24, 0
      %p129 = por %p127, %p128
      %p130 = scmp.ne.s32.totalorder %s118, %s119
      %p131 = scmp.eq.s32.totalorder %s25, 1
      %p132 = por %p130, %p131
      %p134 = scmp.ne.s32.totalorder %s119, %s133
      %p135 = scmp.eq.s32.totalorder %s25, 0
      %p136 = por %p134, %p135
      %s137 = ssub.s32 %s19, %s26
      %p138 = scmp.eq.s32.totalorder %s137, 0
      %s140 = sadd.s32 %s139, 1
      %s141 = scalar_select %p138, %s139, %s140
      %p144 = pneg %p138
      %p145 = scmp.eq.s32.totalorder %s19, 1
      %p146 = por %p144, %p145
      %p147 = scmp.ne.s32.totalorder %s139, %s142
      %p148 = scmp.eq.s32.totalorder %s19, 0
      %p149 = por %p147, %p148
      %p150 = scmp.ne.s32.totalorder %s139, %s142
      %p151 = scmp.eq.s32.totalorder %s24, 1
      %p152 = por %p150, %p151
      %p153 = scmp.ne.s32.totalorder %s142, %s143
      %p154 = scmp.eq.s32.totalorder %s24, 0
      %p155 = por %p153, %p154
      %p156 = scmp.ne.s32.totalorder %s142, %s143
      %p157 = scmp.eq.s32.totalorder %s25, 1
      %p158 = por %p156, %p157
      %p160 = scmp.ne.s32.totalorder %s143, %s159
      %p161 = scmp.eq.s32.totalorder %s25, 0
      %p162 = por %p160, %p161
      %p163 = scmp.le.s32.totalorder 1, %s19
      %p164 = scmp.lt.s32.totalorder %s19, 3
      %p165 = pnand %p163, %p164
      %p166 = pneg %p165
      // Predicated region
      $region9: #{tpu_custom_call.1} parent=5 // pred_check
        _
      $region10: #{tpu_custom_call.1} parent=5 // pred_check_branch
        %168 = sbr.rel (%p165) target = $region12
      $region11: #{tpu_custom_call.1} parent=5 // pred_region
        %s169 = ssub.s32 %s19, 1
        // Predicated region
        $region13: #{tpu_custom_call.1} parent=11 // pred_check
          %p170 = pneg %p66
        $region14: #{tpu_custom_call.1} parent=11 // pred_check_branch
          %172 = sbr.rel (%p170) target = $region16
        $region15: #{tpu_custom_call.1} parent=11 // pred_region
          %s174 = ssub.s32 73728, 73728
          %175 = vsyncadd [#allocation6], %s174
          %s176 = sshll.u32 [#allocation5], 4
          %s177 = int_to_ptr.vmem [resolvable:$true] %s176
          %182 = dma.hbm_to_vmem [thread:$0]  %s1, 73728, %s177, [#allocation6], 768, 768, 48
        $region16: #{tpu_custom_call.1} parent=11 // pred_fallthru
          _
        // Predicated region
        $region17: #{tpu_custom_call.1} parent=11 // pred_check
          %p183 = pneg %p87
        $region18: #{tpu_custom_call.1} parent=11 // pred_check_branch
          %185 = sbr.rel (%p183) target = $region20
        $region19: #{tpu_custom_call.1} parent=11 // pred_region
          %s187 = ssub.s32 96, 96
          %188 = vsyncadd [#allocation6], %s187
          %s190 = sshll.u32 [#allocation7], 4
          %s191 = int_to_ptr.vmem [resolvable:$true] %s190
          %193 = dma.hbm_to_vmem [thread:$0]  %s2, 96, %s191, [#allocation6]
        $region20: #{tpu_custom_call.1} parent=11 // pred_fallthru
          _
        // Predicated region
        $region21: #{tpu_custom_call.1} parent=11 // pred_check
          %p194 = pneg %p108
        $region22: #{tpu_custom_call.1} parent=11 // pred_check_branch
          %196 = sbr.rel (%p194) target = $region24
        $region23: #{tpu_custom_call.1} parent=11 // pred_region
          %s198 = ssub.s32 96, 96
          %199 = vsyncadd [#allocation9], %s198
          %s201 = sshll.u32 [#allocation8], 4
          %s202 = int_to_ptr.vmem [resolvable:$true] %s201
          %204 = dma.hbm_to_vmem [thread:$0]  %s3, 96, %s202, [#allocation9]
        $region24: #{tpu_custom_call.1} parent=11 // pred_fallthru
          _
        // Predicated region
        $region25: #{tpu_custom_call.1} parent=11 // pred_check
          %p205 = pneg %p129
        $region26: #{tpu_custom_call.1} parent=11 // pred_check_branch
          %207 = sbr.rel (%p205) target = $region28
        $region27: #{tpu_custom_call.1} parent=11 // pred_region
          %s209 = ssub.s32 96, 96
          %210 = vsyncadd [#allocation9], %s209
          %s212 = sshll.u32 [#allocation10], 4
          %s213 = int_to_ptr.vmem [resolvable:$true] %s212
          %215 = dma.hbm_to_vmem [thread:$0]  %s4, 96, %s213, [#allocation9]
        $region28: #{tpu_custom_call.1} parent=11 // pred_fallthru
          _
      $region12: #{tpu_custom_call.1} parent=5 // pred_fallthru
        _
      %p216 = scmp.lt.s32.totalorder %s19, 2
      // Predicated region
      $region29: #{tpu_custom_call.1} parent=5 // pred_check
        %p217 = pneg %p216
      $region30: #{tpu_custom_call.1} parent=5 // pred_check_branch
        %219 = sbr.rel (%p217) target = $region32
      $region31: #{tpu_custom_call.1} parent=5 // pred_region
        // Predicated region
        $region33: #{tpu_custom_call.1} parent=31 // pred_check
          %p220 = pneg %p39
        $region34: #{tpu_custom_call.1} parent=31 // pred_check_branch
          %222 = sbr.rel (%p220) target = $region36
        $region35: #{tpu_custom_call.1} parent=31 // pred_region
          %s223 = sand.u32 %s29, 1
          %s224 = scalar_lea.sflag [#allocation3], %s223
          %s225 = sand.u32 %s29, 1
          %s226 = smul.addr %s225, 48
          %s227 = scalar_lea.vmem [#allocation2], %s226
          %s229 = ssub.s32 768, 768
          %230 = vsyncadd %s224, %s229
          %s231 = smul.addr %s19, 6
          %s232 = smul.addr %s231, 128
          %s233 = scalar_lea.hbm %s0, %s232
          %s235 = sshll.u32 %s227, 4
          %s236 = int_to_ptr.vmem [resolvable:$true] %s235
          %238 = dma.hbm_to_vmem [thread:$0]  %s233, 768, %s236, %s224
        $region36: #{tpu_custom_call.1} parent=31 // pred_fallthru
          _
      $region32: #{tpu_custom_call.1} parent=5 // pred_fallthru
        _
      %p239 = scmp.le.s32.totalorder 1, %s19
      %p240 = scmp.lt.s32.totalorder %s19, 3
      %p241 = pnand %p239, %p240
      %p242 = pneg %p241
      // Predicated region
      $region37: #{tpu_custom_call.1} parent=5 // pred_check
        _
      $region38: #{tpu_custom_call.1} parent=5 // pred_check_branch
        %244 = sbr.rel (%p241) target = $region40
      $region39: #{tpu_custom_call.1} parent=5 // pred_region
        %s245 = ssub.s32 %s19, 1
        %s246 = sand.u32 %s32, 1
        %s247 = scalar_lea.sflag [#allocation3], %s246
        %s248 = sand.u32 %s32, 1
        %s249 = smul.addr %s248, 48
        %s250 = scalar_lea.vmem [#allocation2], %s249
        // Predicated region
        $region41: #{tpu_custom_call.1} parent=39 // pred_check
          %p251 = pneg %p45
        $region42: #{tpu_custom_call.1} parent=39 // pred_check_branch
          %253 = sbr.rel (%p251) target = $region44
        $region43: #{tpu_custom_call.1} parent=39 // pred_region
          %254 = dma.done %s247, 768
        $region44: #{tpu_custom_call.1} parent=39 // pred_fallthru
          _
        // Predicated region
        $region45: #{tpu_custom_call.1} parent=39 // pred_check
          %p255 = pneg %p66
        $region46: #{tpu_custom_call.1} parent=39 // pred_check_branch
          %257 = sbr.rel (%p255) target = $region48
        $region47: #{tpu_custom_call.1} parent=39 // pred_region
          %258 = dma.done [#allocation6], 73728
        $region48: #{tpu_custom_call.1} parent=39 // pred_fallthru
          _
        // Predicated region
        $region49: #{tpu_custom_call.1} parent=39 // pred_check
          %p259 = pneg %p87
        $region50: #{tpu_custom_call.1} parent=39 // pred_check_branch
          %261 = sbr.rel (%p259) target = $region52
        $region51: #{tpu_custom_call.1} parent=39 // pred_region
          %262 = dma.done [#allocation6], 96
        $region52: #{tpu_custom_call.1} parent=39 // pred_fallthru
          _
        // Predicated region
        $region53: #{tpu_custom_call.1} parent=39 // pred_check
          %p263 = pneg %p108
        $region54: #{tpu_custom_call.1} parent=39 // pred_check_branch
          %265 = sbr.rel (%p263) target = $region56
        $region55: #{tpu_custom_call.1} parent=39 // pred_region
          %266 = dma.done [#allocation9], 96
        $region56: #{tpu_custom_call.1} parent=39 // pred_fallthru
          _
        // Predicated region
        $region57: #{tpu_custom_call.1} parent=39 // pred_check
          %p267 = pneg %p129
        $region58: #{tpu_custom_call.1} parent=39 // pred_check_branch
          %269 = sbr.rel (%p267) target = $region60
        $region59: #{tpu_custom_call.1} parent=39 // pred_region
          %270 = dma.done [#allocation9], 96
        $region60: #{tpu_custom_call.1} parent=39 // pred_fallthru
          _
        %s271 = sand.u32 %s32, 1
        %s272 = scalar_lea.sflag [#allocation3], %s271
        %s273 = sand.u32 %s32, 1
        %s274 = smul.addr %s273, 48
        %s275 = scalar_lea.vmem [#allocation2], %s274
        %p276 = pneg %p45
        %p277 = pneg %p42
        %p278 = pneg %p66
        %p279 = pneg %p63
        %p280 = pneg %p87
        %p281 = pneg %p84
        %p282 = pneg %p108
        %p283 = pneg %p105
        %p284 = pneg %p129
        %p285 = pneg %p126
        %p286 = pneg %p155
        %p287 = pneg %p152
        %s288 = sand.u32 %s142, 1
        %s289 = scalar_lea.sflag [#allocation4], %s288
        %s290 = sand.u32 %s142, 1
        %s291 = smul.addr %s290, 48
        %s292 = scalar_lea.vmem [#allocation11], %s291
        %v293 = vld [vmem:[%s250] sm:$0xff]
        %v294 = vld [vmem:[%s250 + $0x8] sm:$0xff]
        %v295 = vld [vmem:[%s250 + $0x10] sm:$0xff]
        %v296 = vld [vmem:[%s250 + $0x18] sm:$0xff]
        %v297 = vld [vmem:[%s250 + $0x20] sm:$0xff]
        %v298 = vld [vmem:[%s250 + $0x28] sm:$0xff]
        %v299 = vld [vmem:[#allocation5] sm:$0xff]
        %v300 = vld [vmem:[#allocation5 + $0x8] sm:$0xff]
        %v301 = vld [vmem:[#allocation5 + $0x10] sm:$0xff]
        %v302 = vld [vmem:[#allocation5 + $0x18] sm:$0xff]
        %v303 = vld [vmem:[#allocation5 + $0x20] sm:$0xff]
        %v304 = vld [vmem:[#allocation5 + $0x28] sm:$0xff]
        %v305 = vld [vmem:[#allocation5 + $0x30] sm:$0xff]
        %v306 = vld [vmem:[#allocation5 + $0x38] sm:$0xff]
        %v307 = vld [vmem:[#allocation5 + $0x40] sm:$0xff]
        %v308 = vld [vmem:[#allocation5 + $0x48] sm:$0xff]
        %v309 = vld [vmem:[#allocation5 + $0x50] sm:$0xff]
        %v310 = vld [vmem:[#allocation5 + $0x58] sm:$0xff]
        %v311 = vld [vmem:[#allocation5 + $0x60] sm:$0xff]
        %v312 = vld [vmem:[#allocation5 + $0x68] sm:$0xff]
        %v313 = vld [vmem:[#allocation5 + $0x70] sm:$0xff]
        %v314 = vld [vmem:[#allocation5 + $0x78] sm:$0xff]
        %v315 = vld [vmem:[#allocation5 + $0x80] sm:$0xff]
        %v316 = vld [vmem:[#allocation5 + $0x88] sm:$0xff]
        %v317 = vld [vmem:[#allocation5 + $0x90] sm:$0xff]
        %v318 = vld [vmem:[#allocation5 + $0x98] sm:$0xff]
        %v319 = vld [vmem:[#allocation5 + $0xa0] sm:$0xff]
        %v320 = vld [vmem:[#allocation5 + $0xa8] sm:$0xff]
        %v321 = vld [vmem:[#allocation5 + $0xb0] sm:$0xff]
        %v322 = vld [vmem:[#allocation5 + $0xb8] sm:$0xff]
        %v323 = vld [vmem:[#allocation5 + $0xc0] sm:$0xff]
        %v324 = vld [vmem:[#allocation5 + $0xc8] sm:$0xff]
        %v325 = vld [vmem:[#allocation5 + $0xd0] sm:$0xff]
        %v326 = vld [vmem:[#allocation5 + $0xd8] sm:$0xff]
        %v327 = vld [vmem:[#allocation5 + $0xe0] sm:$0xff]
        %v328 = vld [vmem:[#allocation5 + $0xe8] sm:$0xff]
        %v329 = vld [vmem:[#allocation5 + $0xf0] sm:$0xff]
        %v330 = vld [vmem:[#allocation5 + $0xf8] sm:$0xff]
        %v331 = vld [vmem:[#allocation5 + $0x100] sm:$0xff]
        %v332 = vld [vmem:[#allocation5 + $0x108] sm:$0xff]
        %v333 = vld [vmem:[#allocation5 + $0x110] sm:$0xff]
        %v334 = vld [vmem:[#allocation5 + $0x118] sm:$0xff]
        %v335 = vld [vmem:[#allocation5 + $0x120] sm:$0xff]
        %v336 = vld [vmem:[#allocation5 + $0x128] sm:$0xff]
        %v337 = vld [vmem:[#allocation5 + $0x130] sm:$0xff]
        %v338 = vld [vmem:[#allocation5 + $0x138] sm:$0xff]
        %v339 = vld [vmem:[#allocation5 + $0x140] sm:$0xff]
        %v340 = vld [vmem:[#allocation5 + $0x148] sm:$0xff]
        %v341 = vld [vmem:[#allocation5 + $0x150] sm:$0xff]
        %v342 = vld [vmem:[#allocation5 + $0x158] sm:$0xff]
        %v343 = vld [vmem:[#allocation5 + $0x160] sm:$0xff]
        %v344 = vld [vmem:[#allocation5 + $0x168] sm:$0xff]
        %v345 = vld [vmem:[#allocation5 + $0x170] sm:$0xff]
        %v346 = vld [vmem:[#allocation5 + $0x178] sm:$0xff]
        %v347 = vld [vmem:[#allocation5 + $0x180] sm:$0xff]
        %v348 = vld [vmem:[#allocation5 + $0x188] sm:$0xff]
        %v349 = vld [vmem:[#allocation5 + $0x190] sm:$0xff]
        %v350 = vld [vmem:[#allocation5 + $0x198] sm:$0xff]
        %v351 = vld [vmem:[#allocation5 + $0x1a0] sm:$0xff]
        %v352 = vld [vmem:[#allocation5 + $0x1a8] sm:$0xff]
        %v353 = vld [vmem:[#allocation5 + $0x1b0] sm:$0xff]
        %v354 = vld [vmem:[#allocation5 + $0x1b8] sm:$0xff]
        %v355 = vld [vmem:[#allocation5 + $0x1c0] sm:$0xff]
        %v356 = vld [vmem:[#allocation5 + $0x1c8] sm:$0xff]
        %v357 = vld [vmem:[#allocation5 + $0x1d0] sm:$0xff]
        %v358 = vld [vmem:[#allocation5 + $0x1d8] sm:$0xff]
        %v359 = vld [vmem:[#allocation5 + $0x1e0] sm:$0xff]
        %v360 = vld [vmem:[#allocation5 + $0x1e8] sm:$0xff]
        %v361 = vld [vmem:[#allocation5 + $0x1f0] sm:$0xff]
        %v362 = vld [vmem:[#allocation5 + $0x1f8] sm:$0xff]
        %v363 = vld [vmem:[#allocation5 + $0x200] sm:$0xff]
        %v364 = vld [vmem:[#allocation5 + $0x208] sm:$0xff]
        %v365 = vld [vmem:[#allocation5 + $0x210] sm:$0xff]
        %v366 = vld [vmem:[#allocation5 + $0x218] sm:$0xff]
        %v367 = vld [vmem:[#allocation5 + $0x220] sm:$0xff]
        %v368 = vld [vmem:[#allocation5 + $0x228] sm:$0xff]
        %v369 = vld [vmem:[#allocation5 + $0x230] sm:$0xff]
        %v370 = vld [vmem:[#allocation5 + $0x238] sm:$0xff]
        %v371 = vld [vmem:[#allocation5 + $0x240] sm:$0xff]
        %v372 = vld [vmem:[#allocation5 + $0x248] sm:$0xff]
        %v373 = vld [vmem:[#allocation5 + $0x250] sm:$0xff]
        %v374 = vld [vmem:[#allocation5 + $0x258] sm:$0xff]
        %v375 = vld [vmem:[#allocation5 + $0x260] sm:$0xff]
        %v376 = vld [vmem:[#allocation5 + $0x268] sm:$0xff]
        %v377 = vld [vmem:[#allocation5 + $0x270] sm:$0xff]
        %v378 = vld [vmem:[#allocation5 + $0x278] sm:$0xff]
        %v379 = vld [vmem:[#allocation5 + $0x280] sm:$0xff]
        %v380 = vld [vmem:[#allocation5 + $0x288] sm:$0xff]
        %v381 = vld [vmem:[#allocation5 + $0x290] sm:$0xff]
        %v382 = vld [vmem:[#allocation5 + $0x298] sm:$0xff]
        %v383 = vld [vmem:[#allocation5 + $0x2a0] sm:$0xff]
        %v384 = vld [vmem:[#allocation5 + $0x2a8] sm:$0xff]
        %v385 = vld [vmem:[#allocation5 + $0x2b0] sm:$0xff]
        %v386 = vld [vmem:[#allocation5 + $0x2b8] sm:$0xff]
        %v387 = vld [vmem:[#allocation5 + $0x2c0] sm:$0xff]
        %v388 = vld [vmem:[#allocation5 + $0x2c8] sm:$0xff]
        %v389 = vld [vmem:[#allocation5 + $0x2d0] sm:$0xff]
        %v390 = vld [vmem:[#allocation5 + $0x2d8] sm:$0xff]
        %v391 = vld [vmem:[#allocation5 + $0x2e0] sm:$0xff]
        %v392 = vld [vmem:[#allocation5 + $0x2e8] sm:$0xff]
        %v393 = vld [vmem:[#allocation5 + $0x2f0] sm:$0xff]
        %v394 = vld [vmem:[#allocation5 + $0x2f8] sm:$0xff]
        %v395 = vld [vmem:[#allocation5 + $0x300] sm:$0xff]
        %v396 = vld [vmem:[#allocation5 + $0x308] sm:$0xff]
        %v397 = vld [vmem:[#allocation5 + $0x310] sm:$0xff]
        %v398 = vld [vmem:[#allocation5 + $0x318] sm:$0xff]
        %v399 = vld [vmem:[#allocation5 + $0x320] sm:$0xff]
        %v400 = vld [vmem:[#allocation5 + $0x328] sm:$0xff]
        %v401 = vld [vmem:[#allocation5 + $0x330] sm:$0xff]
        %v402 = vld [vmem:[#allocation5 + $0x338] sm:$0xff]
        %v403 = vld [vmem:[#allocation5 + $0x340] sm:$0xff]
        %v404 = vld [vmem:[#allocation5 + $0x348] sm:$0xff]
        %v405 = vld [vmem:[#allocation5 + $0x350] sm:$0xff]
        %v406 = vld [vmem:[#allocation5 + $0x358] sm:$0xff]
        %v407 = vld [vmem:[#allocation5 + $0x360] sm:$0xff]
        %v408 = vld [vmem:[#allocation5 + $0x368] sm:$0xff]
        %v409 = vld [vmem:[#allocation5 + $0x370] sm:$0xff]
        %v410 = vld [vmem:[#allocation5 + $0x378] sm:$0xff]
        %v411 = vld [vmem:[#allocation5 + $0x380] sm:$0xff]
        %v412 = vld [vmem:[#allocation5 + $0x388] sm:$0xff]
        %v413 = vld [vmem:[#allocation5 + $0x390] sm:$0xff]
        %v414 = vld [vmem:[#allocation5 + $0x398] sm:$0xff]
        %v415 = vld [vmem:[#allocation5 + $0x3a0] sm:$0xff]
        %v416 = vld [vmem:[#allocation5 + $0x3a8] sm:$0xff]
        %v417 = vld [vmem:[#allocation5 + $0x3b0] sm:$0xff]
        %v418 = vld [vmem:[#allocation5 + $0x3b8] sm:$0xff]
        %v419 = vld [vmem:[#allocation5 + $0x3c0] sm:$0xff]
        %v420 = vld [vmem:[#allocation5 + $0x3c8] sm:$0xff]
        %v421 = vld [vmem:[#allocation5 + $0x3d0] sm:$0xff]
        %v422 = vld [vmem:[#allocation5 + $0x3d8] sm:$0xff]
        %v423 = vld [vmem:[#allocation5 + $0x3e0] sm:$0xff]
        %v424 = vld [vmem:[#allocation5 + $0x3e8] sm:$0xff]
        %v425 = vld [vmem:[#allocation5 + $0x3f0] sm:$0xff]
        %v426 = vld [vmem:[#allocation5 + $0x3f8] sm:$0xff]
        %v427 = vld [vmem:[#allocation5 + $0x400] sm:$0xff]
        %v428 = vld [vmem:[#allocation5 + $0x408] sm:$0xff]
        %v429 = vld [vmem:[#allocation5 + $0x410] sm:$0xff]
        %v430 = vld [vmem:[#allocation5 + $0x418] sm:$0xff]
        %v431 = vld [vmem:[#allocation5 + $0x420] sm:$0xff]
        %v432 = vld [vmem:[#allocation5 + $0x428] sm:$0xff]
        %v433 = vld [vmem:[#allocation5 + $0x430] sm:$0xff]
        %v434 = vld [vmem:[#allocation5 + $0x438] sm:$0xff]
        %v435 = vld [vmem:[#allocation5 + $0x440] sm:$0xff]
        %v436 = vld [vmem:[#allocation5 + $0x448] sm:$0xff]
        %v437 = vld [vmem:[#allocation5 + $0x450] sm:$0xff]
        %v438 = vld [vmem:[#allocation5 + $0x458] sm:$0xff]
        %v439 = vld [vmem:[#allocation5 + $0x460] sm:$0xff]
        %v440 = vld [vmem:[#allocation5 + $0x468] sm:$0xff]
        %v441 = vld [vmem:[#allocation5 + $0x470] sm:$0xff]
        %v442 = vld [vmem:[#allocation5 + $0x478] sm:$0xff]
        %v443 = vld [vmem:[#allocation5 + $0x480] sm:$0xff]
        %v444 = vld [vmem:[#allocation5 + $0x488] sm:$0xff]
        %v445 = vld [vmem:[#allocation5 + $0x490] sm:$0xff]
        %v446 = vld [vmem:[#allocation5 + $0x498] sm:$0xff]
        %v447 = vld [vmem:[#allocation5 + $0x4a0] sm:$0xff]
        %v448 = vld [vmem:[#allocation5 + $0x4a8] sm:$0xff]
        %v449 = vld [vmem:[#allocation5 + $0x4b0] sm:$0xff]
        %v450 = vld [vmem:[#allocation5 + $0x4b8] sm:$0xff]
        %v451 = vld [vmem:[#allocation5 + $0x4c0] sm:$0xff]
        %v452 = vld [vmem:[#allocation5 + $0x4c8] sm:$0xff]
        %v453 = vld [vmem:[#allocation5 + $0x4d0] sm:$0xff]
        %v454 = vld [vmem:[#allocation5 + $0x4d8] sm:$0xff]
        %v455 = vld [vmem:[#allocation5 + $0x4e0] sm:$0xff]
        %v456 = vld [vmem:[#allocation5 + $0x4e8] sm:$0xff]
        %v457 = vld [vmem:[#allocation5 + $0x4f0] sm:$0xff]
        %v458 = vld [vmem:[#allocation5 + $0x4f8] sm:$0xff]
        %v459 = vld [vmem:[#allocation5 + $0x500] sm:$0xff]
        %v460 = vld [vmem:[#allocation5 + $0x508] sm:$0xff]
        %v461 = vld [vmem:[#allocation5 + $0x510] sm:$0xff]
        %v462 = vld [vmem:[#allocation5 + $0x518] sm:$0xff]
        %v463 = vld [vmem:[#allocation5 + $0x520] sm:$0xff]
        %v464 = vld [vmem:[#allocation5 + $0x528] sm:$0xff]
        %v465 = vld [vmem:[#allocation5 + $0x530] sm:$0xff]
        %v466 = vld [vmem:[#allocation5 + $0x538] sm:$0xff]
        %v467 = vld [vmem:[#allocation5 + $0x540] sm:$0xff]
        %v468 = vld [vmem:[#allocation5 + $0x548] sm:$0xff]
        %v469 = vld [vmem:[#allocation5 + $0x550] sm:$0xff]
        %v470 = vld [vmem:[#allocation5 + $0x558] sm:$0xff]
        %v471 = vld [vmem:[#allocation5 + $0x560] sm:$0xff]
        %v472 = vld [vmem:[#allocation5 + $0x568] sm:$0xff]
        %v473 = vld [vmem:[#allocation5 + $0x570] sm:$0xff]
        %v474 = vld [vmem:[#allocation5 + $0x578] sm:$0xff]
        %v475 = vld [vmem:[#allocation5 + $0x580] sm:$0xff]
        %v476 = vld [vmem:[#allocation5 + $0x588] sm:$0xff]
        %v477 = vld [vmem:[#allocation5 + $0x590] sm:$0xff]
        %v478 = vld [vmem:[#allocation5 + $0x598] sm:$0xff]
        %v479 = vld [vmem:[#allocation5 + $0x5a0] sm:$0xff]
        %v480 = vld [vmem:[#allocation5 + $0x5a8] sm:$0xff]
        %v481 = vld [vmem:[#allocation5 + $0x5b0] sm:$0xff]
        %v482 = vld [vmem:[#allocation5 + $0x5b8] sm:$0xff]
        %v483 = vld [vmem:[#allocation5 + $0x5c0] sm:$0xff]
        %v484 = vld [vmem:[#allocation5 + $0x5c8] sm:$0xff]
        %v485 = vld [vmem:[#allocation5 + $0x5d0] sm:$0xff]
        %v486 = vld [vmem:[#allocation5 + $0x5d8] sm:$0xff]
        %v487 = vld [vmem:[#allocation5 + $0x5e0] sm:$0xff]
        %v488 = vld [vmem:[#allocation5 + $0x5e8] sm:$0xff]
        %v489 = vld [vmem:[#allocation5 + $0x5f0] sm:$0xff]
        %v490 = vld [vmem:[#allocation5 + $0x5f8] sm:$0xff]
        %v491 = vld [vmem:[#allocation5 + $0x600] sm:$0xff]
        %v492 = vld [vmem:[#allocation5 + $0x608] sm:$0xff]
        %v493 = vld [vmem:[#allocation5 + $0x610] sm:$0xff]
        %v494 = vld [vmem:[#allocation5 + $0x618] sm:$0xff]
        %v495 = vld [vmem:[#allocation5 + $0x620] sm:$0xff]
        %v496 = vld [vmem:[#allocation5 + $0x628] sm:$0xff]
        %v497 = vld [vmem:[#allocation5 + $0x630] sm:$0xff]
        %v498 = vld [vmem:[#allocation5 + $0x638] sm:$0xff]
        %v499 = vld [vmem:[#allocation5 + $0x640] sm:$0xff]
        %v500 = vld [vmem:[#allocation5 + $0x648] sm:$0xff]
        %v501 = vld [vmem:[#allocation5 + $0x650] sm:$0xff]
        %v502 = vld [vmem:[#allocation5 + $0x658] sm:$0xff]
        %v503 = vld [vmem:[#allocation5 + $0x660] sm:$0xff]
        %v504 = vld [vmem:[#allocation5 + $0x668] sm:$0xff]
        %v505 = vld [vmem:[#allocation5 + $0x670] sm:$0xff]
        %v506 = vld [vmem:[#allocation5 + $0x678] sm:$0xff]
        %v507 = vld [vmem:[#allocation5 + $0x680] sm:$0xff]
        %v508 = vld [vmem:[#allocation5 + $0x688] sm:$0xff]
        %v509 = vld [vmem:[#allocation5 + $0x690] sm:$0xff]
        %v510 = vld [vmem:[#allocation5 + $0x698] sm:$0xff]
        %v511 = vld [vmem:[#allocation5 + $0x6a0] sm:$0xff]
        %v512 = vld [vmem:[#allocation5 + $0x6a8] sm:$0xff]
        %v513 = vld [vmem:[#allocation5 + $0x6b0] sm:$0xff]
        %v514 = vld [vmem:[#allocation5 + $0x6b8] sm:$0xff]
        %v515 = vld [vmem:[#allocation5 + $0x6c0] sm:$0xff]
        %v516 = vld [vmem:[#allocation5 + $0x6c8] sm:$0xff]
        %v517 = vld [vmem:[#allocation5 + $0x6d0] sm:$0xff]
        %v518 = vld [vmem:[#allocation5 + $0x6d8] sm:$0xff]
        %v519 = vld [vmem:[#allocation5 + $0x6e0] sm:$0xff]
        %v520 = vld [vmem:[#allocation5 + $0x6e8] sm:$0xff]
        %v521 = vld [vmem:[#allocation5 + $0x6f0] sm:$0xff]
        %v522 = vld [vmem:[#allocation5 + $0x6f8] sm:$0xff]
        %v523 = vld [vmem:[#allocation5 + $0x700] sm:$0xff]
        %v524 = vld [vmem:[#allocation5 + $0x708] sm:$0xff]
        %v525 = vld [vmem:[#allocation5 + $0x710] sm:$0xff]
        %v526 = vld [vmem:[#allocation5 + $0x718] sm:$0xff]
        %v527 = vld [vmem:[#allocation5 + $0x720] sm:$0xff]
        %v528 = vld [vmem:[#allocation5 + $0x728] sm:$0xff]
        %v529 = vld [vmem:[#allocation5 + $0x730] sm:$0xff]
        %v530 = vld [vmem:[#allocation5 + $0x738] sm:$0xff]
        %v531 = vld [vmem:[#allocation5 + $0x740] sm:$0xff]
        %v532 = vld [vmem:[#allocation5 + $0x748] sm:$0xff]
        %v533 = vld [vmem:[#allocation5 + $0x750] sm:$0xff]
        %v534 = vld [vmem:[#allocation5 + $0x758] sm:$0xff]
        %v535 = vld [vmem:[#allocation5 + $0x760] sm:$0xff]
        %v536 = vld [vmem:[#allocation5 + $0x768] sm:$0xff]
        %v537 = vld [vmem:[#allocation5 + $0x770] sm:$0xff]
        %v538 = vld [vmem:[#allocation5 + $0x778] sm:$0xff]
        %v539 = vld [vmem:[#allocation5 + $0x780] sm:$0xff]
        %v540 = vld [vmem:[#allocation5 + $0x788] sm:$0xff]
        %v541 = vld [vmem:[#allocation5 + $0x790] sm:$0xff]
        %v542 = vld [vmem:[#allocation5 + $0x798] sm:$0xff]
        %v543 = vld [vmem:[#allocation5 + $0x7a0] sm:$0xff]
        %v544 = vld [vmem:[#allocation5 + $0x7a8] sm:$0xff]
        %v545 = vld [vmem:[#allocation5 + $0x7b0] sm:$0xff]
        %v546 = vld [vmem:[#allocation5 + $0x7b8] sm:$0xff]
        %v547 = vld [vmem:[#allocation5 + $0x7c0] sm:$0xff]
        %v548 = vld [vmem:[#allocation5 + $0x7c8] sm:$0xff]
        %v549 = vld [vmem:[#allocation5 + $0x7d0] sm:$0xff]
        %v550 = vld [vmem:[#allocation5 + $0x7d8] sm:$0xff]
        %v551 = vld [vmem:[#allocation5 + $0x7e0] sm:$0xff]
        %v552 = vld [vmem:[#allocation5 + $0x7e8] sm:$0xff]
        %v553 = vld [vmem:[#allocation5 + $0x7f0] sm:$0xff]
        %v554 = vld [vmem:[#allocation5 + $0x7f8] sm:$0xff]
        %v555 = vld [vmem:[#allocation5 + $0x800] sm:$0xff]
        %v556 = vld [vmem:[#allocation5 + $0x808] sm:$0xff]
        %v557 = vld [vmem:[#allocation5 + $0x810] sm:$0xff]
        %v558 = vld [vmem:[#allocation5 + $0x818] sm:$0xff]
        %v559 = vld [vmem:[#allocation5 + $0x820] sm:$0xff]
        %v560 = vld [vmem:[#allocation5 + $0x828] sm:$0xff]
        %v561 = vld [vmem:[#allocation5 + $0x830] sm:$0xff]
        %v562 = vld [vmem:[#allocation5 + $0x838] sm:$0xff]
        %v563 = vld [vmem:[#allocation5 + $0x840] sm:$0xff]
        %v564 = vld [vmem:[#allocation5 + $0x848] sm:$0xff]
        %v565 = vld [vmem:[#allocation5 + $0x850] sm:$0xff]
        %v566 = vld [vmem:[#allocation5 + $0x858] sm:$0xff]
        %v567 = vld [vmem:[#allocation5 + $0x860] sm:$0xff]
        %v568 = vld [vmem:[#allocation5 + $0x868] sm:$0xff]
        %v569 = vld [vmem:[#allocation5 + $0x870] sm:$0xff]
        %v570 = vld [vmem:[#allocation5 + $0x878] sm:$0xff]
        %v571 = vld [vmem:[#allocation5 + $0x880] sm:$0xff]
        %v572 = vld [vmem:[#allocation5 + $0x888] sm:$0xff]
        %v573 = vld [vmem:[#allocation5 + $0x890] sm:$0xff]
        %v574 = vld [vmem:[#allocation5 + $0x898] sm:$0xff]
        %v575 = vld [vmem:[#allocation5 + $0x8a0] sm:$0xff]
        %v576 = vld [vmem:[#allocation5 + $0x8a8] sm:$0xff]
        %v577 = vld [vmem:[#allocation5 + $0x8b0] sm:$0xff]
        %v578 = vld [vmem:[#allocation5 + $0x8b8] sm:$0xff]
        %v579 = vld [vmem:[#allocation5 + $0x8c0] sm:$0xff]
        %v580 = vld [vmem:[#allocation5 + $0x8c8] sm:$0xff]
        %v581 = vld [vmem:[#allocation5 + $0x8d0] sm:$0xff]
        %v582 = vld [vmem:[#allocation5 + $0x8d8] sm:$0xff]
        %v583 = vld [vmem:[#allocation5 + $0x8e0] sm:$0xff]
        %v584 = vld [vmem:[#allocation5 + $0x8e8] sm:$0xff]
        %v585 = vld [vmem:[#allocation5 + $0x8f0] sm:$0xff]
        %v586 = vld [vmem:[#allocation5 + $0x8f8] sm:$0xff]
        %v587 = vld [vmem:[#allocation5 + $0x900] sm:$0xff]
        %v588 = vld [vmem:[#allocation5 + $0x908] sm:$0xff]
        %v589 = vld [vmem:[#allocation5 + $0x910] sm:$0xff]
        %v590 = vld [vmem:[#allocation5 + $0x918] sm:$0xff]
        %v591 = vld [vmem:[#allocation5 + $0x920] sm:$0xff]
        %v592 = vld [vmem:[#allocation5 + $0x928] sm:$0xff]
        %v593 = vld [vmem:[#allocation5 + $0x930] sm:$0xff]
        %v594 = vld [vmem:[#allocation5 + $0x938] sm:$0xff]
        %v595 = vld [vmem:[#allocation5 + $0x940] sm:$0xff]
        %v596 = vld [vmem:[#allocation5 + $0x948] sm:$0xff]
        %v597 = vld [vmem:[#allocation5 + $0x950] sm:$0xff]
        %v598 = vld [vmem:[#allocation5 + $0x958] sm:$0xff]
        %v599 = vld [vmem:[#allocation5 + $0x960] sm:$0xff]
        %v600 = vld [vmem:[#allocation5 + $0x968] sm:$0xff]
        %v601 = vld [vmem:[#allocation5 + $0x970] sm:$0xff]
        %v602 = vld [vmem:[#allocation5 + $0x978] sm:$0xff]
        %v603 = vld [vmem:[#allocation5 + $0x980] sm:$0xff]
        %v604 = vld [vmem:[#allocation5 + $0x988] sm:$0xff]
        %v605 = vld [vmem:[#allocation5 + $0x990] sm:$0xff]
        %v606 = vld [vmem:[#allocation5 + $0x998] sm:$0xff]
        %v607 = vld [vmem:[#allocation5 + $0x9a0] sm:$0xff]
        %v608 = vld [vmem:[#allocation5 + $0x9a8] sm:$0xff]
        %v609 = vld [vmem:[#allocation5 + $0x9b0] sm:$0xff]
        %v610 = vld [vmem:[#allocation5 + $0x9b8] sm:$0xff]
        %v611 = vld [vmem:[#allocation5 + $0x9c0] sm:$0xff]
        %v612 = vld [vmem:[#allocation5 + $0x9c8] sm:$0xff]
        %v613 = vld [vmem:[#allocation5 + $0x9d0] sm:$0xff]
        %v614 = vld [vmem:[#allocation5 + $0x9d8] sm:$0xff]
        %v615 = vld [vmem:[#allocation5 + $0x9e0] sm:$0xff]
        %v616 = vld [vmem:[#allocation5 + $0x9e8] sm:$0xff]
        %v617 = vld [vmem:[#allocation5 + $0x9f0] sm:$0xff]
        %v618 = vld [vmem:[#allocation5 + $0x9f8] sm:$0xff]
        %v619 = vld [vmem:[#allocation5 + $0xa00] sm:$0xff]
        %v620 = vld [vmem:[#allocation5 + $0xa08] sm:$0xff]
        %v621 = vld [vmem:[#allocation5 + $0xa10] sm:$0xff]
        %v622 = vld [vmem:[#allocation5 + $0xa18] sm:$0xff]
        %v623 = vld [vmem:[#allocation5 + $0xa20] sm:$0xff]
        %v624 = vld [vmem:[#allocation5 + $0xa28] sm:$0xff]
        %v625 = vld [vmem:[#allocation5 + $0xa30] sm:$0xff]
        %v626 = vld [vmem:[#allocation5 + $0xa38] sm:$0xff]
        %v627 = vld [vmem:[#allocation5 + $0xa40] sm:$0xff]
        %v628 = vld [vmem:[#allocation5 + $0xa48] sm:$0xff]
        %v629 = vld [vmem:[#allocation5 + $0xa50] sm:$0xff]
        %v630 = vld [vmem:[#allocation5 + $0xa58] sm:$0xff]
        %v631 = vld [vmem:[#allocation5 + $0xa60] sm:$0xff]
        %v632 = vld [vmem:[#allocation5 + $0xa68] sm:$0xff]
        %v633 = vld [vmem:[#allocation5 + $0xa70] sm:$0xff]
        %v634 = vld [vmem:[#allocation5 + $0xa78] sm:$0xff]
        %v635 = vld [vmem:[#allocation5 + $0xa80] sm:$0xff]
        %v636 = vld [vmem:[#allocation5 + $0xa88] sm:$0xff]
        %v637 = vld [vmem:[#allocation5 + $0xa90] sm:$0xff]
        %v638 = vld [vmem:[#allocation5 + $0xa98] sm:$0xff]
        %v639 = vld [vmem:[#allocation5 + $0xaa0] sm:$0xff]
        %v640 = vld [vmem:[#allocation5 + $0xaa8] sm:$0xff]
        %v641 = vld [vmem:[#allocation5 + $0xab0] sm:$0xff]
        %v642 = vld [vmem:[#allocation5 + $0xab8] sm:$0xff]
        %v643 = vld [vmem:[#allocation5 + $0xac0] sm:$0xff]
        %v644 = vld [vmem:[#allocation5 + $0xac8] sm:$0xff]
        %v645 = vld [vmem:[#allocation5 + $0xad0] sm:$0xff]
        %v646 = vld [vmem:[#allocation5 + $0xad8] sm:$0xff]
        %v647 = vld [vmem:[#allocation5 + $0xae0] sm:$0xff]
        %v648 = vld [vmem:[#allocation5 + $0xae8] sm:$0xff]
        %v649 = vld [vmem:[#allocation5 + $0xaf0] sm:$0xff]
        %v650 = vld [vmem:[#allocation5 + $0xaf8] sm:$0xff]
        %v651 = vld [vmem:[#allocation5 + $0xb00] sm:$0xff]
        %v652 = vld [vmem:[#allocation5 + $0xb08] sm:$0xff]
        %v653 = vld [vmem:[#allocation5 + $0xb10] sm:$0xff]
        %v654 = vld [vmem:[#allocation5 + $0xb18] sm:$0xff]
        %v655 = vld [vmem:[#allocation5 + $0xb20] sm:$0xff]
        %v656 = vld [vmem:[#allocation5 + $0xb28] sm:$0xff]
        %v657 = vld [vmem:[#allocation5 + $0xb30] sm:$0xff]
        %v658 = vld [vmem:[#allocation5 + $0xb38] sm:$0xff]
        %v659 = vld [vmem:[#allocation5 + $0xb40] sm:$0xff]
        %v660 = vld [vmem:[#allocation5 + $0xb48] sm:$0xff]
        %v661 = vld [vmem:[#allocation5 + $0xb50] sm:$0xff]
        %v662 = vld [vmem:[#allocation5 + $0xb58] sm:$0xff]
        %v663 = vld [vmem:[#allocation5 + $0xb60] sm:$0xff]
        %v664 = vld [vmem:[#allocation5 + $0xb68] sm:$0xff]
        %v665 = vld [vmem:[#allocation5 + $0xb70] sm:$0xff]
        %v666 = vld [vmem:[#allocation5 + $0xb78] sm:$0xff]
        %v667 = vld [vmem:[#allocation5 + $0xb80] sm:$0xff]
        %v668 = vld [vmem:[#allocation5 + $0xb88] sm:$0xff]
        %v669 = vld [vmem:[#allocation5 + $0xb90] sm:$0xff]
        %v670 = vld [vmem:[#allocation5 + $0xb98] sm:$0xff]
        %v671 = vld [vmem:[#allocation5 + $0xba0] sm:$0xff]
        %v672 = vld [vmem:[#allocation5 + $0xba8] sm:$0xff]
        %v673 = vld [vmem:[#allocation5 + $0xbb0] sm:$0xff]
        %v674 = vld [vmem:[#allocation5 + $0xbb8] sm:$0xff]
        %v675 = vld [vmem:[#allocation5 + $0xbc0] sm:$0xff]
        %v676 = vld [vmem:[#allocation5 + $0xbc8] sm:$0xff]
        %v677 = vld [vmem:[#allocation5 + $0xbd0] sm:$0xff]
        %v678 = vld [vmem:[#allocation5 + $0xbd8] sm:$0xff]
        %v679 = vld [vmem:[#allocation5 + $0xbe0] sm:$0xff]
        %v680 = vld [vmem:[#allocation5 + $0xbe8] sm:$0xff]
        %v681 = vld [vmem:[#allocation5 + $0xbf0] sm:$0xff]
        %v682 = vld [vmem:[#allocation5 + $0xbf8] sm:$0xff]
        %v683 = vld [vmem:[#allocation5 + $0xc00] sm:$0xff]
        %v684 = vld [vmem:[#allocation5 + $0xc08] sm:$0xff]
        %v685 = vld [vmem:[#allocation5 + $0xc10] sm:$0xff]
        %v686 = vld [vmem:[#allocation5 + $0xc18] sm:$0xff]
        %v687 = vld [vmem:[#allocation5 + $0xc20] sm:$0xff]
        %v688 = vld [vmem:[#allocation5 + $0xc28] sm:$0xff]
        %v689 = vld [vmem:[#allocation5 + $0xc30] sm:$0xff]
        %v690 = vld [vmem:[#allocation5 + $0xc38] sm:$0xff]
        %v691 = vld [vmem:[#allocation5 + $0xc40] sm:$0xff]
        %v692 = vld [vmem:[#allocation5 + $0xc48] sm:$0xff]
        %v693 = vld [vmem:[#allocation5 + $0xc50] sm:$0xff]
        %v694 = vld [vmem:[#allocation5 + $0xc58] sm:$0xff]
        %v695 = vld [vmem:[#allocation5 + $0xc60] sm:$0xff]
        %v696 = vld [vmem:[#allocation5 + $0xc68] sm:$0xff]
        %v697 = vld [vmem:[#allocation5 + $0xc70] sm:$0xff]
        %v698 = vld [vmem:[#allocation5 + $0xc78] sm:$0xff]
        %v699 = vld [vmem:[#allocation5 + $0xc80] sm:$0xff]
        %v700 = vld [vmem:[#allocation5 + $0xc88] sm:$0xff]
        %v701 = vld [vmem:[#allocation5 + $0xc90] sm:$0xff]
        %v702 = vld [vmem:[#allocation5 + $0xc98] sm:$0xff]
        %v703 = vld [vmem:[#allocation5 + $0xca0] sm:$0xff]
        %v704 = vld [vmem:[#allocation5 + $0xca8] sm:$0xff]
        %v705 = vld [vmem:[#allocation5 + $0xcb0] sm:$0xff]
        %v706 = vld [vmem:[#allocation5 + $0xcb8] sm:$0xff]
        %v707 = vld [vmem:[#allocation5 + $0xcc0] sm:$0xff]
        %v708 = vld [vmem:[#allocation5 + $0xcc8] sm:$0xff]
        %v709 = vld [vmem:[#allocation5 + $0xcd0] sm:$0xff]
        %v710 = vld [vmem:[#allocation5 + $0xcd8] sm:$0xff]
        %v711 = vld [vmem:[#allocation5 + $0xce0] sm:$0xff]
        %v712 = vld [vmem:[#allocation5 + $0xce8] sm:$0xff]
        %v713 = vld [vmem:[#allocation5 + $0xcf0] sm:$0xff]
        %v714 = vld [vmem:[#allocation5 + $0xcf8] sm:$0xff]
        %v715 = vld [vmem:[#allocation5 + $0xd00] sm:$0xff]
        %v716 = vld [vmem:[#allocation5 + $0xd08] sm:$0xff]
        %v717 = vld [vmem:[#allocation5 + $0xd10] sm:$0xff]
        %v718 = vld [vmem:[#allocation5 + $0xd18] sm:$0xff]
        %v719 = vld [vmem:[#allocation5 + $0xd20] sm:$0xff]
        %v720 = vld [vmem:[#allocation5 + $0xd28] sm:$0xff]
        %v721 = vld [vmem:[#allocation5 + $0xd30] sm:$0xff]
        %v722 = vld [vmem:[#allocation5 + $0xd38] sm:$0xff]
        %v723 = vld [vmem:[#allocation5 + $0xd40] sm:$0xff]
        %v724 = vld [vmem:[#allocation5 + $0xd48] sm:$0xff]
        %v725 = vld [vmem:[#allocation5 + $0xd50] sm:$0xff]
        %v726 = vld [vmem:[#allocation5 + $0xd58] sm:$0xff]
        %v727 = vld [vmem:[#allocation5 + $0xd60] sm:$0xff]
        %v728 = vld [vmem:[#allocation5 + $0xd68] sm:$0xff]
        %v729 = vld [vmem:[#allocation5 + $0xd70] sm:$0xff]
        %v730 = vld [vmem:[#allocation5 + $0xd78] sm:$0xff]
        %v731 = vld [vmem:[#allocation5 + $0xd80] sm:$0xff]
        %v732 = vld [vmem:[#allocation5 + $0xd88] sm:$0xff]
        %v733 = vld [vmem:[#allocation5 + $0xd90] sm:$0xff]
        %v734 = vld [vmem:[#allocation5 + $0xd98] sm:$0xff]
        %v735 = vld [vmem:[#allocation5 + $0xda0] sm:$0xff]
        %v736 = vld [vmem:[#allocation5 + $0xda8] sm:$0xff]
        %v737 = vld [vmem:[#allocation5 + $0xdb0] sm:$0xff]
        %v738 = vld [vmem:[#allocation5 + $0xdb8] sm:$0xff]
        %v739 = vld [vmem:[#allocation5 + $0xdc0] sm:$0xff]
        %v740 = vld [vmem:[#allocation5 + $0xdc8] sm:$0xff]
        %v741 = vld [vmem:[#allocation5 + $0xdd0] sm:$0xff]
        %v742 = vld [vmem:[#allocation5 + $0xdd8] sm:$0xff]
        %v743 = vld [vmem:[#allocation5 + $0xde0] sm:$0xff]
        %v744 = vld [vmem:[#allocation5 + $0xde8] sm:$0xff]
        %v745 = vld [vmem:[#allocation5 + $0xdf0] sm:$0xff]
        %v746 = vld [vmem:[#allocation5 + $0xdf8] sm:$0xff]
        %v747 = vld [vmem:[#allocation5 + $0xe00] sm:$0xff]
        %v748 = vld [vmem:[#allocation5 + $0xe08] sm:$0xff]
        %v749 = vld [vmem:[#allocation5 + $0xe10] sm:$0xff]
        %v750 = vld [vmem:[#allocation5 + $0xe18] sm:$0xff]
        %v751 = vld [vmem:[#allocation5 + $0xe20] sm:$0xff]
        %v752 = vld [vmem:[#allocation5 + $0xe28] sm:$0xff]
        %v753 = vld [vmem:[#allocation5 + $0xe30] sm:$0xff]
        %v754 = vld [vmem:[#allocation5 + $0xe38] sm:$0xff]
        %v755 = vld [vmem:[#allocation5 + $0xe40] sm:$0xff]
        %v756 = vld [vmem:[#allocation5 + $0xe48] sm:$0xff]
        %v757 = vld [vmem:[#allocation5 + $0xe50] sm:$0xff]
        %v758 = vld [vmem:[#allocation5 + $0xe58] sm:$0xff]
        %v759 = vld [vmem:[#allocation5 + $0xe60] sm:$0xff]
        %v760 = vld [vmem:[#allocation5 + $0xe68] sm:$0xff]
        %v761 = vld [vmem:[#allocation5 + $0xe70] sm:$0xff]
        %v762 = vld [vmem:[#allocation5 + $0xe78] sm:$0xff]
        %v763 = vld [vmem:[#allocation5 + $0xe80] sm:$0xff]
        %v764 = vld [vmem:[#allocation5 + $0xe88] sm:$0xff]
        %v765 = vld [vmem:[#allocation5 + $0xe90] sm:$0xff]
        %v766 = vld [vmem:[#allocation5 + $0xe98] sm:$0xff]
        %v767 = vld [vmem:[#allocation5 + $0xea0] sm:$0xff]
        %v768 = vld [vmem:[#allocation5 + $0xea8] sm:$0xff]
        %v769 = vld [vmem:[#allocation5 + $0xeb0] sm:$0xff]
        %v770 = vld [vmem:[#allocation5 + $0xeb8] sm:$0xff]
        %v771 = vld [vmem:[#allocation5 + $0xec0] sm:$0xff]
        %v772 = vld [vmem:[#allocation5 + $0xec8] sm:$0xff]
        %v773 = vld [vmem:[#allocation5 + $0xed0] sm:$0xff]
        %v774 = vld [vmem:[#allocation5 + $0xed8] sm:$0xff]
        %v775 = vld [vmem:[#allocation5 + $0xee0] sm:$0xff]
        %v776 = vld [vmem:[#allocation5 + $0xee8] sm:$0xff]
        %v777 = vld [vmem:[#allocation5 + $0xef0] sm:$0xff]
        %v778 = vld [vmem:[#allocation5 + $0xef8] sm:$0xff]
        %v779 = vld [vmem:[#allocation5 + $0xf00] sm:$0xff]
        %v780 = vld [vmem:[#allocation5 + $0xf08] sm:$0xff]
        %v781 = vld [vmem:[#allocation5 + $0xf10] sm:$0xff]
        %v782 = vld [vmem:[#allocation5 + $0xf18] sm:$0xff]
        %v783 = vld [vmem:[#allocation5 + $0xf20] sm:$0xff]
        %v784 = vld [vmem:[#allocation5 + $0xf28] sm:$0xff]
        %v785 = vld [vmem:[#allocation5 + $0xf30] sm:$0xff]
        %v786 = vld [vmem:[#allocation5 + $0xf38] sm:$0xff]
        %v787 = vld [vmem:[#allocation5 + $0xf40] sm:$0xff]
        %v788 = vld [vmem:[#allocation5 + $0xf48] sm:$0xff]
        %v789 = vld [vmem:[#allocation5 + $0xf50] sm:$0xff]
        %v790 = vld [vmem:[#allocation5 + $0xf58] sm:$0xff]
        %v791 = vld [vmem:[#allocation5 + $0xf60] sm:$0xff]
        %v792 = vld [vmem:[#allocation5 + $0xf68] sm:$0xff]
        %v793 = vld [vmem:[#allocation5 + $0xf70] sm:$0xff]
        %v794 = vld [vmem:[#allocation5 + $0xf78] sm:$0xff]
        %v795 = vld [vmem:[#allocation5 + $0xf80] sm:$0xff]
        %v796 = vld [vmem:[#allocation5 + $0xf88] sm:$0xff]
        %v797 = vld [vmem:[#allocation5 + $0xf90] sm:$0xff]
        %v798 = vld [vmem:[#allocation5 + $0xf98] sm:$0xff]
        %v799 = vld [vmem:[#allocation5 + $0xfa0] sm:$0xff]
        %v800 = vld [vmem:[#allocation5 + $0xfa8] sm:$0xff]
        %v801 = vld [vmem:[#allocation5 + $0xfb0] sm:$0xff]
        %v802 = vld [vmem:[#allocation5 + $0xfb8] sm:$0xff]
        %v803 = vld [vmem:[#allocation5 + $0xfc0] sm:$0xff]
        %v804 = vld [vmem:[#allocation5 + $0xfc8] sm:$0xff]
        %v805 = vld [vmem:[#allocation5 + $0xfd0] sm:$0xff]
        %v806 = vld [vmem:[#allocation5 + $0xfd8] sm:$0xff]
        %v807 = vld [vmem:[#allocation5 + $0xfe0] sm:$0xff]
        %v808 = vld [vmem:[#allocation5 + $0xfe8] sm:$0xff]
        %v809 = vld [vmem:[#allocation5 + $0xff0] sm:$0xff]
        %v810 = vld [vmem:[#allocation5 + $0xff8] sm:$0xff]
        %v811 = vld [vmem:[#allocation5 + $0x1000] sm:$0xff]
        %v812 = vld [vmem:[#allocation5 + $0x1008] sm:$0xff]
        %v813 = vld [vmem:[#allocation5 + $0x1010] sm:$0xff]
        %v814 = vld [vmem:[#allocation5 + $0x1018] sm:$0xff]
        %v815 = vld [vmem:[#allocation5 + $0x1020] sm:$0xff]
        %v816 = vld [vmem:[#allocation5 + $0x1028] sm:$0xff]
        %v817 = vld [vmem:[#allocation5 + $0x1030] sm:$0xff]
        %v818 = vld [vmem:[#allocation5 + $0x1038] sm:$0xff]
        %v819 = vld [vmem:[#allocation5 + $0x1040] sm:$0xff]
        %v820 = vld [vmem:[#allocation5 + $0x1048] sm:$0xff]
        %v821 = vld [vmem:[#allocation5 + $0x1050] sm:$0xff]
        %v822 = vld [vmem:[#allocation5 + $0x1058] sm:$0xff]
        %v823 = vld [vmem:[#allocation5 + $0x1060] sm:$0xff]
        %v824 = vld [vmem:[#allocation5 + $0x1068] sm:$0xff]
        %v825 = vld [vmem:[#allocation5 + $0x1070] sm:$0xff]
        %v826 = vld [vmem:[#allocation5 + $0x1078] sm:$0xff]
        %v827 = vld [vmem:[#allocation5 + $0x1080] sm:$0xff]
        %v828 = vld [vmem:[#allocation5 + $0x1088] sm:$0xff]
        %v829 = vld [vmem:[#allocation5 + $0x1090] sm:$0xff]
        %v830 = vld [vmem:[#allocation5 + $0x1098] sm:$0xff]
        %v831 = vld [vmem:[#allocation5 + $0x10a0] sm:$0xff]
        %v832 = vld [vmem:[#allocation5 + $0x10a8] sm:$0xff]
        %v833 = vld [vmem:[#allocation5 + $0x10b0] sm:$0xff]
        %v834 = vld [vmem:[#allocation5 + $0x10b8] sm:$0xff]
        %v835 = vld [vmem:[#allocation5 + $0x10c0] sm:$0xff]
        %v836 = vld [vmem:[#allocation5 + $0x10c8] sm:$0xff]
        %v837 = vld [vmem:[#allocation5 + $0x10d0] sm:$0xff]
        %v838 = vld [vmem:[#allocation5 + $0x10d8] sm:$0xff]
        %v839 = vld [vmem:[#allocation5 + $0x10e0] sm:$0xff]
        %v840 = vld [vmem:[#allocation5 + $0x10e8] sm:$0xff]
        %v841 = vld [vmem:[#allocation5 + $0x10f0] sm:$0xff]
        %v842 = vld [vmem:[#allocation5 + $0x10f8] sm:$0xff]
        %v843 = vld [vmem:[#allocation5 + $0x1100] sm:$0xff]
        %v844 = vld [vmem:[#allocation5 + $0x1108] sm:$0xff]
        %v845 = vld [vmem:[#allocation5 + $0x1110] sm:$0xff]
        %v846 = vld [vmem:[#allocation5 + $0x1118] sm:$0xff]
        %v847 = vld [vmem:[#allocation5 + $0x1120] sm:$0xff]
        %v848 = vld [vmem:[#allocation5 + $0x1128] sm:$0xff]
        %v849 = vld [vmem:[#allocation5 + $0x1130] sm:$0xff]
        %v850 = vld [vmem:[#allocation5 + $0x1138] sm:$0xff]
        %v851 = vld [vmem:[#allocation5 + $0x1140] sm:$0xff]
        %v852 = vld [vmem:[#allocation5 + $0x1148] sm:$0xff]
        %v853 = vld [vmem:[#allocation5 + $0x1150] sm:$0xff]
        %v854 = vld [vmem:[#allocation5 + $0x1158] sm:$0xff]
        %v855 = vld [vmem:[#allocation5 + $0x1160] sm:$0xff]
        %v856 = vld [vmem:[#allocation5 + $0x1168] sm:$0xff]
        %v857 = vld [vmem:[#allocation5 + $0x1170] sm:$0xff]
        %v858 = vld [vmem:[#allocation5 + $0x1178] sm:$0xff]
        %v859 = vld [vmem:[#allocation5 + $0x1180] sm:$0xff]
        %v860 = vld [vmem:[#allocation5 + $0x1188] sm:$0xff]
        %v861 = vld [vmem:[#allocation5 + $0x1190] sm:$0xff]
        %v862 = vld [vmem:[#allocation5 + $0x1198] sm:$0xff]
        %v863 = vld [vmem:[#allocation5 + $0x11a0] sm:$0xff]
        %v864 = vld [vmem:[#allocation5 + $0x11a8] sm:$0xff]
        %v865 = vld [vmem:[#allocation5 + $0x11b0] sm:$0xff]
        %v866 = vld [vmem:[#allocation5 + $0x11b8] sm:$0xff]
        %v867 = vld [vmem:[#allocation5 + $0x11c0] sm:$0xff]
        %v868 = vld [vmem:[#allocation5 + $0x11c8] sm:$0xff]
        %v869 = vld [vmem:[#allocation5 + $0x11d0] sm:$0xff]
        %v870 = vld [vmem:[#allocation5 + $0x11d8] sm:$0xff]
        %v871 = vld [vmem:[#allocation5 + $0x11e0] sm:$0xff]
        %v872 = vld [vmem:[#allocation5 + $0x11e8] sm:$0xff]
        %v873 = vld [vmem:[#allocation5 + $0x11f0] sm:$0xff]
        %v874 = vld [vmem:[#allocation5 + $0x11f8] sm:$0xff]
        %v875 = vld [vmem:[#allocation7] sm:$0x3f]
        %v877 = vlaneseq
        %v878 = vshrl.u32 %v877, 7
        %v879 = vsub.s32 0, %v878
        %v880 = vrot.slane %v875, %v879
        %v881 = vlaneseq
        %v882 = vshrl.u32 %v881, 7
        %v883 = vsub.s32 1, %v882
        %v884 = vrot.slane %v875, %v883
        %v885 = vlaneseq
        %v886 = vshrl.u32 %v885, 7
        %v887 = vsub.s32 2, %v886
        %v888 = vrot.slane %v875, %v887
        %v889 = vlaneseq
        %v890 = vshrl.u32 %v889, 7
        %v891 = vsub.s32 3, %v890
        %v892 = vrot.slane %v875, %v891
        %v893 = vlaneseq
        %v894 = vshrl.u32 %v893, 7
        %v895 = vsub.s32 4, %v894
        %v896 = vrot.slane %v875, %v895
        %v897 = vlaneseq
        %v898 = vshrl.u32 %v897, 7
        %v899 = vsub.s32 5, %v898
        %v900 = vrot.slane %v875, %v899
        %907 = vmatprep.subr.mxu0 %v390
        %908 = vmatpush1.msra.mxu0 %v389
        %909 = vmatprep.subr.mxu0 %v384
        %910 = vmatpush1.msra.mxu0 %v383
        %911 = vmatprep.subr.mxu0 %v378
        %912 = vmatpush1.msra.mxu0 %v377
        %913 = vmatprep.subr.mxu0 %v372
        %914 = vmatpush1.msra.mxu0 %v371
        %915 = vmatprep.subr.mxu0 %v366
        %916 = vmatpush1.msra.mxu0 %v365
        %917 = vmatprep.subr.mxu0 %v360
        %918 = vmatpush1.msra.mxu0 %v359
        %919 = vmatprep.subr.mxu0 %v354
        %920 = vmatpush1.msra.mxu0 %v353
        %921 = vmatprep.subr.mxu0 %v348
        %922 = vmatpush1.msra.mxu0 %v347
        %923 = vmatprep.subr.mxu0 %v342
        %924 = vmatpush1.msra.mxu0 %v341
        %925 = vmatprep.subr.mxu0 %v336
        %926 = vmatpush1.msra.mxu0 %v335
        %927 = vmatprep.subr.mxu0 %v330
        %928 = vmatpush1.msra.mxu0 %v329
        %929 = vmatprep.subr.mxu0 %v324
        %930 = vmatpush1.msra.mxu0 %v323
        %931 = vmatprep.subr.mxu0 %v318
        %932 = vmatpush1.msra.mxu0 %v317
        %933 = vmatprep.subr.mxu0 %v312
        %934 = vmatpush1.msra.mxu0 %v311
        %935 = vmatprep.subr.mxu0 %v306
        %936 = vmatpush1.msra.mxu0 %v305
        %937 = vmatprep.subr.mxu0 %v300
        %938 = vmatpush1.msra.mxu0 %v299
        %939 = vmatprep.subr.mxu0 %v486
        %940 = vmatpush2.msra.mxu0 %v485
        %941 = vmatprep.subr.mxu0 %v480
        %942 = vmatpush2.msra.mxu0 %v479
        %943 = vmatprep.subr.mxu0 %v474
        %944 = vmatpush2.msra.mxu0 %v473
        %945 = vmatprep.subr.mxu0 %v468
        %946 = vmatpush2.msra.mxu0 %v467
        %947 = vmatprep.subr.mxu0 %v462
        %948 = vmatpush2.msra.mxu0 %v461
        %949 = vmatprep.subr.mxu0 %v456
        %950 = vmatpush2.msra.mxu0 %v455
        %951 = vmatprep.subr.mxu0 %v450
        %952 = vmatpush2.msra.mxu0 %v449
        %953 = vmatprep.subr.mxu0 %v444
        %954 = vmatpush2.msra.mxu0 %v443
        %955 = vmatprep.subr.mxu0 %v438
        %956 = vmatpush2.msra.mxu0 %v437
        %957 = vmatprep.subr.mxu0 %v432
        %958 = vmatpush2.msra.mxu0 %v431
        %959 = vmatprep.subr.mxu0 %v426
        %960 = vmatpush2.msra.mxu0 %v425
        %961 = vmatprep.subr.mxu0 %v420
        %962 = vmatpush2.msra.mxu0 %v419
        %963 = vmatprep.subr.mxu0 %v414
        %964 = vmatpush2.msra.mxu0 %v413
        %965 = vmatprep.subr.mxu0 %v408
        %966 = vmatpush2.msra.mxu0 %v407
        %967 = vmatprep.subr.mxu0 %v402
        %968 = vmatpush2.msra.mxu0 %v401
        %969 = vmatprep.subr.mxu0 %v396
        %970 = vmatpush2.msra.mxu0 %v395
        %971 = vmatprep.mubr.f32.mxu0 %v294
        %972 = vmatmul.mubr.f32.gmra.mxu0 %v293
        %v973 = vpop.f32.mrf.mxu0
        %v974 = vadd.f32 %v880, %v973
        %v975 = vpop.f32.mrf.mxu0
        %v976 = vadd.f32 %v884, %v975
        %977 = vdwg.mxu0
        %978 = vmatprep.subr.mxu0 %v582
        %979 = vmatpush1.msra.mxu0 %v581
        %980 = vmatprep.subr.mxu0 %v576
        %981 = vmatpush1.msra.mxu0 %v575
        %982 = vmatprep.subr.mxu0 %v570
        %983 = vmatpush1.msra.mxu0 %v569
        %984 = vmatprep.subr.mxu0 %v564
        %985 = vmatpush1.msra.mxu0 %v563
        %986 = vmatprep.subr.mxu0 %v558
        %987 = vmatpush1.msra.mxu0 %v557
        %988 = vmatprep.subr.mxu0 %v552
        %989 = vmatpush1.msra.mxu0 %v551
        %990 = vmatprep.subr.mxu0 %v546
        %991 = vmatpush1.msra.mxu0 %v545
        %992 = vmatprep.subr.mxu0 %v540
        %993 = vmatpush1.msra.mxu0 %v539
        %994 = vmatprep.subr.mxu0 %v534
        %995 = vmatpush1.msra.mxu0 %v533
        %996 = vmatprep.subr.mxu0 %v528
        %997 = vmatpush1.msra.mxu0 %v527
        %998 = vmatprep.subr.mxu0 %v522
        %999 = vmatpush1.msra.mxu0 %v521
        %1000 = vmatprep.subr.mxu0 %v516
        %1001 = vmatpush1.msra.mxu0 %v515
        %1002 = vmatprep.subr.mxu0 %v510
        %1003 = vmatpush1.msra.mxu0 %v509
        %1004 = vmatprep.subr.mxu0 %v504
        %1005 = vmatpush1.msra.mxu0 %v503
        %1006 = vmatprep.subr.mxu0 %v498
        %1007 = vmatpush1.msra.mxu0 %v497
        %1008 = vmatprep.subr.mxu0 %v492
        %1009 = vmatpush1.msra.mxu0 %v491
        %1010 = vmatprep.subr.mxu0 %v678
        %1011 = vmatpush2.msra.mxu0 %v677
        %1012 = vmatprep.subr.mxu0 %v672
        %1013 = vmatpush2.msra.mxu0 %v671
        %1014 = vmatprep.subr.mxu0 %v666
        %1015 = vmatpush2.msra.mxu0 %v665
        %1016 = vmatprep.subr.mxu0 %v660
        %1017 = vmatpush2.msra.mxu0 %v659
        %1018 = vmatprep.subr.mxu0 %v654
        %1019 = vmatpush2.msra.mxu0 %v653
        %1020 = vmatprep.subr.mxu0 %v648
        %1021 = vmatpush2.msra.mxu0 %v647
        %1022 = vmatprep.subr.mxu0 %v642
        %1023 = vmatpush2.msra.mxu0 %v641
        %1024 = vmatprep.subr.mxu0 %v636
        %1025 = vmatpush2.msra.mxu0 %v635
        %1026 = vmatprep.subr.mxu0 %v630
        %1027 = vmatpush2.msra.mxu0 %v629
        %1028 = vmatprep.subr.mxu0 %v624
        %1029 = vmatpush2.msra.mxu0 %v623
        %1030 = vmatprep.subr.mxu0 %v618
        %1031 = vmatpush2.msra.mxu0 %v617
        %1032 = vmatprep.subr.mxu0 %v612
        %1033 = vmatpush2.msra.mxu0 %v611
        %1034 = vmatprep.subr.mxu0 %v606
        %1035 = vmatpush2.msra.mxu0 %v605
        %1036 = vmatprep.subr.mxu0 %v600
        %1037 = vmatpush2.msra.mxu0 %v599
        %1038 = vmatprep.subr.mxu0 %v594
        %1039 = vmatpush2.msra.mxu0 %v593
        %1040 = vmatprep.subr.mxu0 %v588
        %1041 = vmatpush2.msra.mxu0 %v587
        %1042 = vmatprep.mubr.f32.mxu0 %v296
        %1043 = vmatmul.mubr.f32.gmra.mxu0 %v295
        %v1044 = vpop.f32.mrf.mxu0
        %v1045 = vadd.f32 %v974, %v1044
        %v1046 = vpop.f32.mrf.mxu0
        %v1047 = vadd.f32 %v976, %v1046
        %1048 = vdwg.mxu0
        %1049 = vmatprep.subr.mxu0 %v774
        %1050 = vmatpush1.msra.mxu0 %v773
        %1051 = vmatprep.subr.mxu0 %v768
        %1052 = vmatpush1.msra.mxu0 %v767
        %1053 = vmatprep.subr.mxu0 %v762
        %1054 = vmatpush1.msra.mxu0 %v761
        %1055 = vmatprep.subr.mxu0 %v756
        %1056 = vmatpush1.msra.mxu0 %v755
        %1057 = vmatprep.subr.mxu0 %v750
        %1058 = vmatpush1.msra.mxu0 %v749
        %1059 = vmatprep.subr.mxu0 %v744
        %1060 = vmatpush1.msra.mxu0 %v743
        %1061 = vmatprep.subr.mxu0 %v738
        %1062 = vmatpush1.msra.mxu0 %v737
        %1063 = vmatprep.subr.mxu0 %v732
        %1064 = vmatpush1.msra.mxu0 %v731
        %1065 = vmatprep.subr.mxu0 %v726
        %1066 = vmatpush1.msra.mxu0 %v725
        %1067 = vmatprep.subr.mxu0 %v720
        %1068 = vmatpush1.msra.mxu0 %v719
        %1069 = vmatprep.subr.mxu0 %v714
        %1070 = vmatpush1.msra.mxu0 %v713
        %1071 = vmatprep.subr.mxu0 %v708
        %1072 = vmatpush1.msra.mxu0 %v707
        %1073 = vmatprep.subr.mxu0 %v702
        %1074 = vmatpush1.msra.mxu0 %v701
        %1075 = vmatprep.subr.mxu0 %v696
        %1076 = vmatpush1.msra.mxu0 %v695
        %1077 = vmatprep.subr.mxu0 %v690
        %1078 = vmatpush1.msra.mxu0 %v689
        %1079 = vmatprep.subr.mxu0 %v684
        %1080 = vmatpush1.msra.mxu0 %v683
        %1081 = vmatprep.subr.mxu0 %v870
        %1082 = vmatpush2.msra.mxu0 %v869
        %1083 = vmatprep.subr.mxu0 %v864
        %1084 = vmatpush2.msra.mxu0 %v863
        %1085 = vmatprep.subr.mxu0 %v858
        %1086 = vmatpush2.msra.mxu0 %v857
        %1087 = vmatprep.subr.mxu0 %v852
        %1088 = vmatpush2.msra.mxu0 %v851
        %1089 = vmatprep.subr.mxu0 %v846
        %1090 = vmatpush2.msra.mxu0 %v845
        %1091 = vmatprep.subr.mxu0 %v840
        %1092 = vmatpush2.msra.mxu0 %v839
        %1093 = vmatprep.subr.mxu0 %v834
        %1094 = vmatpush2.msra.mxu0 %v833
        %1095 = vmatprep.subr.mxu0 %v828
        %1096 = vmatpush2.msra.mxu0 %v827
        %1097 = vmatprep.subr.mxu0 %v822
        %1098 = vmatpush2.msra.mxu0 %v821
        %1099 = vmatprep.subr.mxu0 %v816
        %1100 = vmatpush2.msra.mxu0 %v815
        %1101 = vmatprep.subr.mxu0 %v810
        %1102 = vmatpush2.msra.mxu0 %v809
        %1103 = vmatprep.subr.mxu0 %v804
        %1104 = vmatpush2.msra.mxu0 %v803
        %1105 = vmatprep.subr.mxu0 %v798
        %1106 = vmatpush2.msra.mxu0 %v797
        %1107 = vmatprep.subr.mxu0 %v792
        %1108 = vmatpush2.msra.mxu0 %v791
        %1109 = vmatprep.subr.mxu0 %v786
        %1110 = vmatpush2.msra.mxu0 %v785
        %1111 = vmatprep.subr.mxu0 %v780
        %1112 = vmatpush2.msra.mxu0 %v779
        %1113 = vmatprep.mubr.f32.mxu0 %v298
        %1114 = vmatmul.mubr.f32.gmra.mxu0 %v297
        %v1115 = vpop.f32.mrf.mxu0
        %v1116 = vadd.f32 %v1045, %v1115
        %v1117 = vpop.f32.mrf.mxu0
        %v1118 = vadd.f32 %v1047, %v1117
        %1119 = vdwg.mxu0
        %1120 = vmatprep.subr.mxu0 %v392
        %1121 = vmatpush1.msra.mxu0 %v391
        %1122 = vmatprep.subr.mxu0 %v386
        %1123 = vmatpush1.msra.mxu0 %v385
        %1124 = vmatprep.subr.mxu0 %v380
        %1125 = vmatpush1.msra.mxu0 %v379
        %1126 = vmatprep.subr.mxu0 %v374
        %1127 = vmatpush1.msra.mxu0 %v373
        %1128 = vmatprep.subr.mxu0 %v368
        %1129 = vmatpush1.msra.mxu0 %v367
        %1130 = vmatprep.subr.mxu0 %v362
        %1131 = vmatpush1.msra.mxu0 %v361
        %1132 = vmatprep.subr.mxu0 %v356
        %1133 = vmatpush1.msra.mxu0 %v355
        %1134 = vmatprep.subr.mxu0 %v350
        %1135 = vmatpush1.msra.mxu0 %v349
        %1136 = vmatprep.subr.mxu0 %v344
        %1137 = vmatpush1.msra.mxu0 %v343
        %1138 = vmatprep.subr.mxu0 %v338
        %1139 = vmatpush1.msra.mxu0 %v337
        %1140 = vmatprep.subr.mxu0 %v332
        %1141 = vmatpush1.msra.mxu0 %v331
        %1142 = vmatprep.subr.mxu0 %v326
        %1143 = vmatpush1.msra.mxu0 %v325
        %1144 = vmatprep.subr.mxu0 %v320
        %1145 = vmatpush1.msra.mxu0 %v319
        %1146 = vmatprep.subr.mxu0 %v314
        %1147 = vmatpush1.msra.mxu0 %v313
        %1148 = vmatprep.subr.mxu0 %v308
        %1149 = vmatpush1.msra.mxu0 %v307
        %1150 = vmatprep.subr.mxu0 %v302
        %1151 = vmatpush1.msra.mxu0 %v301
        %1152 = vmatprep.subr.mxu0 %v488
        %1153 = vmatpush2.msra.mxu0 %v487
        %1154 = vmatprep.subr.mxu0 %v482
        %1155 = vmatpush2.msra.mxu0 %v481
        %1156 = vmatprep.subr.mxu0 %v476
        %1157 = vmatpush2.msra.mxu0 %v475
        %1158 = vmatprep.subr.mxu0 %v470
        %1159 = vmatpush2.msra.mxu0 %v469
        %1160 = vmatprep.subr.mxu0 %v464
        %1161 = vmatpush2.msra.mxu0 %v463
        %1162 = vmatprep.subr.mxu0 %v458
        %1163 = vmatpush2.msra.mxu0 %v457
        %1164 = vmatprep.subr.mxu0 %v452
        %1165 = vmatpush2.msra.mxu0 %v451
        %1166 = vmatprep.subr.mxu0 %v446
        %1167 = vmatpush2.msra.mxu0 %v445
        %1168 = vmatprep.subr.mxu0 %v440
        %1169 = vmatpush2.msra.mxu0 %v439
        %1170 = vmatprep.subr.mxu0 %v434
        %1171 = vmatpush2.msra.mxu0 %v433
        %1172 = vmatprep.subr.mxu0 %v428
        %1173 = vmatpush2.msra.mxu0 %v427
        %1174 = vmatprep.subr.mxu0 %v422
        %1175 = vmatpush2.msra.mxu0 %v421
        %1176 = vmatprep.subr.mxu0 %v416
        %1177 = vmatpush2.msra.mxu0 %v415
        %1178 = vmatprep.subr.mxu0 %v410
        %1179 = vmatpush2.msra.mxu0 %v409
        %1180 = vmatprep.subr.mxu0 %v404
        %1181 = vmatpush2.msra.mxu0 %v403
        %1182 = vmatprep.subr.mxu0 %v398
        %1183 = vmatpush2.msra.mxu0 %v397
        %1184 = vmatprep.mubr.f32.mxu0 %v294
        %1185 = vmatmul.mubr.f32.gmra.mxu0 %v293
        %v1186 = vpop.f32.mrf.mxu0
        %v1187 = vadd.f32 %v888, %v1186
        %v1188 = vpop.f32.mrf.mxu0
        %v1189 = vadd.f32 %v892, %v1188
        %1190 = vdwg.mxu0
        %1191 = vmatprep.subr.mxu0 %v584
        %1192 = vmatpush1.msra.mxu0 %v583
        %1193 = vmatprep.subr.mxu0 %v578
        %1194 = vmatpush1.msra.mxu0 %v577
        %1195 = vmatprep.subr.mxu0 %v572
        %1196 = vmatpush1.msra.mxu0 %v571
        %1197 = vmatprep.subr.mxu0 %v566
        %1198 = vmatpush1.msra.mxu0 %v565
        %1199 = vmatprep.subr.mxu0 %v560
        %1200 = vmatpush1.msra.mxu0 %v559
        %1201 = vmatprep.subr.mxu0 %v554
        %1202 = vmatpush1.msra.mxu0 %v553
        %1203 = vmatprep.subr.mxu0 %v548
        %1204 = vmatpush1.msra.mxu0 %v547
        %1205 = vmatprep.subr.mxu0 %v542
        %1206 = vmatpush1.msra.mxu0 %v541
        %1207 = vmatprep.subr.mxu0 %v536
        %1208 = vmatpush1.msra.mxu0 %v535
        %1209 = vmatprep.subr.mxu0 %v530
        %1210 = vmatpush1.msra.mxu0 %v529
        %1211 = vmatprep.subr.mxu0 %v524
        %1212 = vmatpush1.msra.mxu0 %v523
        %1213 = vmatprep.subr.mxu0 %v518
        %1214 = vmatpush1.msra.mxu0 %v517
        %1215 = vmatprep.subr.mxu0 %v512
        %1216 = vmatpush1.msra.mxu0 %v511
        %1217 = vmatprep.subr.mxu0 %v506
        %1218 = vmatpush1.msra.mxu0 %v505
        %1219 = vmatprep.subr.mxu0 %v500
        %1220 = vmatpush1.msra.mxu0 %v499
        %1221 = vmatprep.subr.mxu0 %v494
        %1222 = vmatpush1.msra.mxu0 %v493
        %1223 = vmatprep.subr.mxu0 %v680
        %1224 = vmatpush2.msra.mxu0 %v679
        %1225 = vmatprep.subr.mxu0 %v674
        %1226 = vmatpush2.msra.mxu0 %v673
        %1227 = vmatprep.subr.mxu0 %v668
        %1228 = vmatpush2.msra.mxu0 %v667
        %1229 = vmatprep.subr.mxu0 %v662
        %1230 = vmatpush2.msra.mxu0 %v661
        %1231 = vmatprep.subr.mxu0 %v656
        %1232 = vmatpush2.msra.mxu0 %v655
        %1233 = vmatprep.subr.mxu0 %v650
        %1234 = vmatpush2.msra.mxu0 %v649
        %1235 = vmatprep.subr.mxu0 %v644
        %1236 = vmatpush2.msra.mxu0 %v643
        %1237 = vmatprep.subr.mxu0 %v638
        %1238 = vmatpush2.msra.mxu0 %v637
        %1239 = vmatprep.subr.mxu0 %v632
        %1240 = vmatpush2.msra.mxu0 %v631
        %1241 = vmatprep.subr.mxu0 %v626
        %1242 = vmatpush2.msra.mxu0 %v625
        %1243 = vmatprep.subr.mxu0 %v620
        %1244 = vmatpush2.msra.mxu0 %v619
        %1245 = vmatprep.subr.mxu0 %v614
        %1246 = vmatpush2.msra.mxu0 %v613
        %1247 = vmatprep.subr.mxu0 %v608
        %1248 = vmatpush2.msra.mxu0 %v607
        %1249 = vmatprep.subr.mxu0 %v602
        %1250 = vmatpush2.msra.mxu0 %v601
        %1251 = vmatprep.subr.mxu0 %v596
        %1252 = vmatpush2.msra.mxu0 %v595
        %1253 = vmatprep.subr.mxu0 %v590
        %1254 = vmatpush2.msra.mxu0 %v589
        %1255 = vmatprep.mubr.f32.mxu0 %v296
        %1256 = vmatmul.mubr.f32.gmra.mxu0 %v295
        %v1257 = vpop.f32.mrf.mxu0
        %v1258 = vadd.f32 %v1187, %v1257
        %v1259 = vpop.f32.mrf.mxu0
        %v1260 = vadd.f32 %v1189, %v1259
        %1261 = vdwg.mxu0
        %1262 = vmatprep.subr.mxu0 %v776
        %1263 = vmatpush1.msra.mxu0 %v775
        %1264 = vmatprep.subr.mxu0 %v770
        %1265 = vmatpush1.msra.mxu0 %v769
        %1266 = vmatprep.subr.mxu0 %v764
        %1267 = vmatpush1.msra.mxu0 %v763
        %1268 = vmatprep.subr.mxu0 %v758
        %1269 = vmatpush1.msra.mxu0 %v757
        %1270 = vmatprep.subr.mxu0 %v752
        %1271 = vmatpush1.msra.mxu0 %v751
        %1272 = vmatprep.subr.mxu0 %v746
        %1273 = vmatpush1.msra.mxu0 %v745
        %1274 = vmatprep.subr.mxu0 %v740
        %1275 = vmatpush1.msra.mxu0 %v739
        %1276 = vmatprep.subr.mxu0 %v734
        %1277 = vmatpush1.msra.mxu0 %v733
        %1278 = vmatprep.subr.mxu0 %v728
        %1279 = vmatpush1.msra.mxu0 %v727
        %1280 = vmatprep.subr.mxu0 %v722
        %1281 = vmatpush1.msra.mxu0 %v721
        %1282 = vmatprep.subr.mxu0 %v716
        %1283 = vmatpush1.msra.mxu0 %v715
        %1284 = vmatprep.subr.mxu0 %v710
        %1285 = vmatpush1.msra.mxu0 %v709
        %1286 = vmatprep.subr.mxu0 %v704
        %1287 = vmatpush1.msra.mxu0 %v703
        %1288 = vmatprep.subr.mxu0 %v698
        %1289 = vmatpush1.msra.mxu0 %v697
        %1290 = vmatprep.subr.mxu0 %v692
        %1291 = vmatpush1.msra.mxu0 %v691
        %1292 = vmatprep.subr.mxu0 %v686
        %1293 = vmatpush1.msra.mxu0 %v685
        %1294 = vmatprep.subr.mxu0 %v872
        %1295 = vmatpush2.msra.mxu0 %v871
        %1296 = vmatprep.subr.mxu0 %v866
        %1297 = vmatpush2.msra.mxu0 %v865
        %1298 = vmatprep.subr.mxu0 %v860
        %1299 = vmatpush2.msra.mxu0 %v859
        %1300 = vmatprep.subr.mxu0 %v854
        %1301 = vmatpush2.msra.mxu0 %v853
        %1302 = vmatprep.subr.mxu0 %v848
        %1303 = vmatpush2.msra.mxu0 %v847
        %1304 = vmatprep.subr.mxu0 %v842
        %1305 = vmatpush2.msra.mxu0 %v841
        %1306 = vmatprep.subr.mxu0 %v836
        %1307 = vmatpush2.msra.mxu0 %v835
        %1308 = vmatprep.subr.mxu0 %v830
        %1309 = vmatpush2.msra.mxu0 %v829
        %1310 = vmatprep.subr.mxu0 %v824
        %1311 = vmatpush2.msra.mxu0 %v823
        %1312 = vmatprep.subr.mxu0 %v818
        %1313 = vmatpush2.msra.mxu0 %v817
        %1314 = vmatprep.subr.mxu0 %v812
        %1315 = vmatpush2.msra.mxu0 %v811
        %1316 = vmatprep.subr.mxu0 %v806
        %1317 = vmatpush2.msra.mxu0 %v805
        %1318 = vmatprep.subr.mxu0 %v800
        %1319 = vmatpush2.msra.mxu0 %v799
        %1320 = vmatprep.subr.mxu0 %v794
        %1321 = vmatpush2.msra.mxu0 %v793
        %1322 = vmatprep.subr.mxu0 %v788
        %1323 = vmatpush2.msra.mxu0 %v787
        %1324 = vmatprep.subr.mxu0 %v782
        %1325 = vmatpush2.msra.mxu0 %v781
        %1326 = vmatprep.mubr.f32.mxu0 %v298
        %1327 = vmatmul.mubr.f32.gmra.mxu0 %v297
        %v1328 = vpop.f32.mrf.mxu0
        %v1329 = vadd.f32 %v1258, %v1328
        %v1330 = vpop.f32.mrf.mxu0
        %v1331 = vadd.f32 %v1260, %v1330
        %1332 = vdwg.mxu0
        %1333 = vmatprep.subr.mxu0 %v394
        %1334 = vmatpush1.msra.mxu0 %v393
        %1335 = vmatprep.subr.mxu0 %v388
        %1336 = vmatpush1.msra.mxu0 %v387
        %1337 = vmatprep.subr.mxu0 %v382
        %1338 = vmatpush1.msra.mxu0 %v381
        %1339 = vmatprep.subr.mxu0 %v376
        %1340 = vmatpush1.msra.mxu0 %v375
        %1341 = vmatprep.subr.mxu0 %v370
        %1342 = vmatpush1.msra.mxu0 %v369
        %1343 = vmatprep.subr.mxu0 %v364
        %1344 = vmatpush1.msra.mxu0 %v363
        %1345 = vmatprep.subr.mxu0 %v358
        %1346 = vmatpush1.msra.mxu0 %v357
        %1347 = vmatprep.subr.mxu0 %v352
        %1348 = vmatpush1.msra.mxu0 %v351
        %1349 = vmatprep.subr.mxu0 %v346
        %1350 = vmatpush1.msra.mxu0 %v345
        %1351 = vmatprep.subr.mxu0 %v340
        %1352 = vmatpush1.msra.mxu0 %v339
        %1353 = vmatprep.subr.mxu0 %v334
        %1354 = vmatpush1.msra.mxu0 %v333
        %1355 = vmatprep.subr.mxu0 %v328
        %1356 = vmatpush1.msra.mxu0 %v327
        %1357 = vmatprep.subr.mxu0 %v322
        %1358 = vmatpush1.msra.mxu0 %v321
        %1359 = vmatprep.subr.mxu0 %v316
        %1360 = vmatpush1.msra.mxu0 %v315
        %1361 = vmatprep.subr.mxu0 %v310
        %1362 = vmatpush1.msra.mxu0 %v309
        %1363 = vmatprep.subr.mxu0 %v304
        %1364 = vmatpush1.msra.mxu0 %v303
        %1365 = vmatprep.subr.mxu0 %v490
        %1366 = vmatpush2.msra.mxu0 %v489
        %1367 = vmatprep.subr.mxu0 %v484
        %1368 = vmatpush2.msra.mxu0 %v483
        %1369 = vmatprep.subr.mxu0 %v478
        %1370 = vmatpush2.msra.mxu0 %v477
        %1371 = vmatprep.subr.mxu0 %v472
        %1372 = vmatpush2.msra.mxu0 %v471
        %1373 = vmatprep.subr.mxu0 %v466
        %1374 = vmatpush2.msra.mxu0 %v465
        %1375 = vmatprep.subr.mxu0 %v460
        %1376 = vmatpush2.msra.mxu0 %v459
        %1377 = vmatprep.subr.mxu0 %v454
        %1378 = vmatpush2.msra.mxu0 %v453
        %1379 = vmatprep.subr.mxu0 %v448
        %1380 = vmatpush2.msra.mxu0 %v447
        %1381 = vmatprep.subr.mxu0 %v442
        %1382 = vmatpush2.msra.mxu0 %v441
        %1383 = vmatprep.subr.mxu0 %v436
        %1384 = vmatpush2.msra.mxu0 %v435
        %1385 = vmatprep.subr.mxu0 %v430
        %1386 = vmatpush2.msra.mxu0 %v429
        %1387 = vmatprep.subr.mxu0 %v424
        %1388 = vmatpush2.msra.mxu0 %v423
        %1389 = vmatprep.subr.mxu0 %v418
        %1390 = vmatpush2.msra.mxu0 %v417
        %1391 = vmatprep.subr.mxu0 %v412
        %1392 = vmatpush2.msra.mxu0 %v411
        %1393 = vmatprep.subr.mxu0 %v406
        %1394 = vmatpush2.msra.mxu0 %v405
        %1395 = vmatprep.subr.mxu0 %v400
        %1396 = vmatpush2.msra.mxu0 %v399
        %1397 = vmatprep.mubr.f32.mxu0 %v294
        %1398 = vmatmul.mubr.f32.gmra.mxu0 %v293
        %v1399 = vpop.f32.mrf.mxu0
        %v1400 = vadd.f32 %v896, %v1399
        %v1401 = vpop.f32.mrf.mxu0
        %v1402 = vadd.f32 %v900, %v1401
        %1403 = vdwg.mxu0
        %1404 = vmatprep.subr.mxu0 %v586
        %1405 = vmatpush1.msra.mxu0 %v585
        %1406 = vmatprep.subr.mxu0 %v580
        %1407 = vmatpush1.msra.mxu0 %v579
        %1408 = vmatprep.subr.mxu0 %v574
        %1409 = vmatpush1.msra.mxu0 %v573
        %1410 = vmatprep.subr.mxu0 %v568
        %1411 = vmatpush1.msra.mxu0 %v567
        %1412 = vmatprep.subr.mxu0 %v562
        %1413 = vmatpush1.msra.mxu0 %v561
        %1414 = vmatprep.subr.mxu0 %v556
        %1415 = vmatpush1.msra.mxu0 %v555
        %1416 = vmatprep.subr.mxu0 %v550
        %1417 = vmatpush1.msra.mxu0 %v549
        %1418 = vmatprep.subr.mxu0 %v544
        %1419 = vmatpush1.msra.mxu0 %v543
        %1420 = vmatprep.subr.mxu0 %v538
        %1421 = vmatpush1.msra.mxu0 %v537
        %1422 = vmatprep.subr.mxu0 %v532
        %1423 = vmatpush1.msra.mxu0 %v531
        %1424 = vmatprep.subr.mxu0 %v526
        %1425 = vmatpush1.msra.mxu0 %v525
        %1426 = vmatprep.subr.mxu0 %v520
        %1427 = vmatpush1.msra.mxu0 %v519
        %1428 = vmatprep.subr.mxu0 %v514
        %1429 = vmatpush1.msra.mxu0 %v513
        %1430 = vmatprep.subr.mxu0 %v508
        %1431 = vmatpush1.msra.mxu0 %v507
        %1432 = vmatprep.subr.mxu0 %v502
        %1433 = vmatpush1.msra.mxu0 %v501
        %1434 = vmatprep.subr.mxu0 %v496
        %1435 = vmatpush1.msra.mxu0 %v495
        %1436 = vmatprep.subr.mxu0 %v682
        %1437 = vmatpush2.msra.mxu0 %v681
        %1438 = vmatprep.subr.mxu0 %v676
        %1439 = vmatpush2.msra.mxu0 %v675
        %1440 = vmatprep.subr.mxu0 %v670
        %1441 = vmatpush2.msra.mxu0 %v669
        %1442 = vmatprep.subr.mxu0 %v664
        %1443 = vmatpush2.msra.mxu0 %v663
        %1444 = vmatprep.subr.mxu0 %v658
        %1445 = vmatpush2.msra.mxu0 %v657
        %1446 = vmatprep.subr.mxu0 %v652
        %1447 = vmatpush2.msra.mxu0 %v651
        %1448 = vmatprep.subr.mxu0 %v646
        %1449 = vmatpush2.msra.mxu0 %v645
        %1450 = vmatprep.subr.mxu0 %v640
        %1451 = vmatpush2.msra.mxu0 %v639
        %1452 = vmatprep.subr.mxu0 %v634
        %1453 = vmatpush2.msra.mxu0 %v633
        %1454 = vmatprep.subr.mxu0 %v628
        %1455 = vmatpush2.msra.mxu0 %v627
        %1456 = vmatprep.subr.mxu0 %v622
        %1457 = vmatpush2.msra.mxu0 %v621
        %1458 = vmatprep.subr.mxu0 %v616
        %1459 = vmatpush2.msra.mxu0 %v615
        %1460 = vmatprep.subr.mxu0 %v610
        %1461 = vmatpush2.msra.mxu0 %v609
        %1462 = vmatprep.subr.mxu0 %v604
        %1463 = vmatpush2.msra.mxu0 %v603
        %1464 = vmatprep.subr.mxu0 %v598
        %1465 = vmatpush2.msra.mxu0 %v597
        %1466 = vmatprep.subr.mxu0 %v592
        %1467 = vmatpush2.msra.mxu0 %v591
        %1468 = vmatprep.mubr.f32.mxu0 %v296
        %1469 = vmatmul.mubr.f32.gmra.mxu0 %v295
        %v1470 = vpop.f32.mrf.mxu0
        %v1471 = vadd.f32 %v1400, %v1470
        %v1472 = vpop.f32.mrf.mxu0
        %v1473 = vadd.f32 %v1402, %v1472
        %1474 = vdwg.mxu0
        %1475 = vmatprep.subr.mxu0 %v778
        %1476 = vmatpush1.msra.mxu0 %v777
        %1477 = vmatprep.subr.mxu0 %v772
        %1478 = vmatpush1.msra.mxu0 %v771
        %1479 = vmatprep.subr.mxu0 %v766
        %1480 = vmatpush1.msra.mxu0 %v765
        %1481 = vmatprep.subr.mxu0 %v760
        %1482 = vmatpush1.msra.mxu0 %v759
        %1483 = vmatprep.subr.mxu0 %v754
        %1484 = vmatpush1.msra.mxu0 %v753
        %1485 = vmatprep.subr.mxu0 %v748
        %1486 = vmatpush1.msra.mxu0 %v747
        %1487 = vmatprep.subr.mxu0 %v742
        %1488 = vmatpush1.msra.mxu0 %v741
        %1489 = vmatprep.subr.mxu0 %v736
        %1490 = vmatpush1.msra.mxu0 %v735
        %1491 = vmatprep.subr.mxu0 %v730
        %1492 = vmatpush1.msra.mxu0 %v729
        %1493 = vmatprep.subr.mxu0 %v724
        %1494 = vmatpush1.msra.mxu0 %v723
        %1495 = vmatprep.subr.mxu0 %v718
        %1496 = vmatpush1.msra.mxu0 %v717
        %1497 = vmatprep.subr.mxu0 %v712
        %1498 = vmatpush1.msra.mxu0 %v711
        %1499 = vmatprep.subr.mxu0 %v706
        %1500 = vmatpush1.msra.mxu0 %v705
        %1501 = vmatprep.subr.mxu0 %v700
        %1502 = vmatpush1.msra.mxu0 %v699
        %1503 = vmatprep.subr.mxu0 %v694
        %1504 = vmatpush1.msra.mxu0 %v693
        %1505 = vmatprep.subr.mxu0 %v688
        %1506 = vmatpush1.msra.mxu0 %v687
        %1507 = vmatprep.subr.mxu0 %v874
        %1508 = vmatpush2.msra.mxu0 %v873
        %1509 = vmatprep.subr.mxu0 %v868
        %1510 = vmatpush2.msra.mxu0 %v867
        %1511 = vmatprep.subr.mxu0 %v862
        %1512 = vmatpush2.msra.mxu0 %v861
        %1513 = vmatprep.subr.mxu0 %v856
        %1514 = vmatpush2.msra.mxu0 %v855
        %1515 = vmatprep.subr.mxu0 %v850
        %1516 = vmatpush2.msra.mxu0 %v849
        %1517 = vmatprep.subr.mxu0 %v844
        %1518 = vmatpush2.msra.mxu0 %v843
        %1519 = vmatprep.subr.mxu0 %v838
        %1520 = vmatpush2.msra.mxu0 %v837
        %1521 = vmatprep.subr.mxu0 %v832
        %1522 = vmatpush2.msra.mxu0 %v831
        %1523 = vmatprep.subr.mxu0 %v826
        %1524 = vmatpush2.msra.mxu0 %v825
        %1525 = vmatprep.subr.mxu0 %v820
        %1526 = vmatpush2.msra.mxu0 %v819
        %1527 = vmatprep.subr.mxu0 %v814
        %1528 = vmatpush2.msra.mxu0 %v813
        %1529 = vmatprep.subr.mxu0 %v808
        %1530 = vmatpush2.msra.mxu0 %v807
        %1531 = vmatprep.subr.mxu0 %v802
        %1532 = vmatpush2.msra.mxu0 %v801
        %1533 = vmatprep.subr.mxu0 %v796
        %1534 = vmatpush2.msra.mxu0 %v795
        %1535 = vmatprep.subr.mxu0 %v790
        %1536 = vmatpush2.msra.mxu0 %v789
        %1537 = vmatprep.subr.mxu0 %v784
        %1538 = vmatpush2.msra.mxu0 %v783
        %1539 = vmatprep.mubr.f32.mxu0 %v298
        %1540 = vmatmul.mubr.f32.gmra.mxu0 %v297
        %v1541 = vpop.f32.mrf.mxu0
        %v1542 = vadd.f32 %v1471, %v1541
        %v1543 = vpop.f32.mrf.mxu0
        %v1544 = vadd.f32 %v1473, %v1543
        %1545 = vdwg.mxu0
        %v1546 = vmul.f32 %v1116, 0.5
        %v1547 = vmul.f32 %v1118, 0.5
        %v1548 = vmul.f32 %v1329, 0.5
        %v1549 = vmul.f32 %v1331, 0.5
        %v1550 = vmul.f32 %v1542, 0.5
        %v1551 = vmul.f32 %v1544, 0.5
        %v1552 = vmul.f32 %v1116, 0.70710677
        %v1553 = vmul.f32 %v1118, 0.70710677
        %v1554 = vmul.f32 %v1329, 0.70710677
        %v1555 = vmul.f32 %v1331, 0.70710677
        %v1556 = vmul.f32 %v1542, 0.70710677
        %v1557 = vmul.f32 %v1544, 0.70710677
        %v1558 = verf.f32.pop %v1552
        %v1559 = verf.f32.pop %v1553
        %v1560 = verf.f32.pop %v1554
        %v1561 = verf.f32.pop %v1555
        %v1562 = verf.f32.pop %v1556
        %v1563 = verf.f32.pop %v1557
        %v1564 = vadd.f32 %v1558, 1.0
        %v1565 = vadd.f32 %v1559, 1.0
        %v1566 = vadd.f32 %v1560, 1.0
        %v1567 = vadd.f32 %v1561, 1.0
        %v1568 = vadd.f32 %v1562, 1.0
        %v1569 = vadd.f32 %v1563, 1.0
        %v1570 = vmul.f32 %v1546, %v1564
        %v1571 = vmul.f32 %v1547, %v1565
        %v1572 = vmul.f32 %v1548, %v1566
        %v1573 = vmul.f32 %v1549, %v1567
        %v1574 = vmul.f32 %v1550, %v1568
        %v1575 = vmul.f32 %v1551, %v1569
        %v1576 = vadd.f32 %v1570, %v1571
        %v1577 = vadd.f32 %v1576, %v1572
        %v1578 = vadd.f32 %v1577, %v1573
        %v1579 = vadd.f32 %v1578, %v1574
        %v1580 = vadd.f32 %v1579, %v1575
        %1581 = vadd.xlane.f32.xlu0 %v1580
        %v1582 = vpop.xlane.xlu0 %1581
        %v1583 = vrcp.pop 768.0
        %v1584 = vmul.f32 %v1582, %v1583
        %v1585 = vsub.f32 %v1570, %v1584
        %v1586 = vsub.f32 %v1571, %v1584
        %v1587 = vsub.f32 %v1572, %v1584
        %v1588 = vsub.f32 %v1573, %v1584
        %v1589 = vsub.f32 %v1574, %v1584
        %v1590 = vsub.f32 %v1575, %v1584
        %v1591 = vmul.f32 %v1585, %v1585
        %v1592 = vmul.f32 %v1586, %v1586
        %v1593 = vmul.f32 %v1587, %v1587
        %v1594 = vmul.f32 %v1588, %v1588
        %v1595 = vmul.f32 %v1589, %v1589
        %v1596 = vmul.f32 %v1590, %v1590
        %v1597 = vadd.f32 %v1591, %v1592
        %v1598 = vadd.f32 %v1597, %v1593
        %v1599 = vadd.f32 %v1598, %v1594
        %v1600 = vadd.f32 %v1599, %v1595
        %v1601 = vadd.f32 %v1600, %v1596
        %1602 = vadd.xlane.f32.xlu0 %v1601
        %v1603 = vpop.xlane.xlu0 %1602
        %v1604 = vmul.f32 %v1603, %v1583
        %v1605 = vadd.f32 %v1604, 1e-12
        %v1606 = vrsqrt.pop %v1605
        %v1607 = vmul.f32 %v1585, %v1606
        %v1608 = vmul.f32 %v1586, %v1606
        %v1609 = vmul.f32 %v1587, %v1606
        %v1610 = vmul.f32 %v1588, %v1606
        %v1611 = vmul.f32 %v1589, %v1606
        %v1612 = vmul.f32 %v1590, %v1606
        %v1613 = vld [vmem:[#allocation8] sm:$0x3f]
        %v1615 = vlaneseq
        %v1616 = vshrl.u32 %v1615, 7
        %v1617 = vsub.s32 0, %v1616
        %v1618 = vrot.slane %v1613, %v1617
        %v1619 = vlaneseq
        %v1620 = vshrl.u32 %v1619, 7
        %v1621 = vsub.s32 1, %v1620
        %v1622 = vrot.slane %v1613, %v1621
        %v1623 = vlaneseq
        %v1624 = vshrl.u32 %v1623, 7
        %v1625 = vsub.s32 2, %v1624
        %v1626 = vrot.slane %v1613, %v1625
        %v1627 = vlaneseq
        %v1628 = vshrl.u32 %v1627, 7
        %v1629 = vsub.s32 3, %v1628
        %v1630 = vrot.slane %v1613, %v1629
        %v1631 = vlaneseq
        %v1632 = vshrl.u32 %v1631, 7
        %v1633 = vsub.s32 4, %v1632
        %v1634 = vrot.slane %v1613, %v1633
        %v1635 = vlaneseq
        %v1636 = vshrl.u32 %v1635, 7
        %v1637 = vsub.s32 5, %v1636
        %v1638 = vrot.slane %v1613, %v1637
        %v1645 = vmul.f32 %v1607, %v1618
        %v1646 = vmul.f32 %v1608, %v1622
        %v1647 = vmul.f32 %v1609, %v1626
        %v1648 = vmul.f32 %v1610, %v1630
        %v1649 = vmul.f32 %v1611, %v1634
        %v1650 = vmul.f32 %v1612, %v1638
        %v1651 = vld [vmem:[#allocation10] sm:$0x3f]
        %v1653 = vlaneseq
        %v1654 = vshrl.u32 %v1653, 7
        %v1655 = vsub.s32 0, %v1654
        %v1656 = vrot.slane %v1651, %v1655
        %v1657 = vlaneseq
        %v1658 = vshrl.u32 %v1657, 7
        %v1659 = vsub.s32 1, %v1658
        %v1660 = vrot.slane %v1651, %v1659
        %v1661 = vlaneseq
        %v1662 = vshrl.u32 %v1661, 7
        %v1663 = vsub.s32 2, %v1662
        %v1664 = vrot.slane %v1651, %v1663
        %v1665 = vlaneseq
        %v1666 = vshrl.u32 %v1665, 7
        %v1667 = vsub.s32 3, %v1666
        %v1668 = vrot.slane %v1651, %v1667
        %v1669 = vlaneseq
        %v1670 = vshrl.u32 %v1669, 7
        %v1671 = vsub.s32 4, %v1670
        %v1672 = vrot.slane %v1651, %v1671
        %v1673 = vlaneseq
        %v1674 = vshrl.u32 %v1673, 7
        %v1675 = vsub.s32 5, %v1674
        %v1676 = vrot.slane %v1651, %v1675
        %v1683 = vadd.f32 %v1645, %v1656
        %v1684 = vadd.f32 %v1646, %v1660
        %v1685 = vadd.f32 %v1647, %v1664
        %v1686 = vadd.f32 %v1648, %v1668
        %v1687 = vadd.f32 %v1649, %v1672
        %v1688 = vadd.f32 %v1650, %v1676
        %1689 = vst [vmem:[%s292] sm:$0xff] %v1683
        %1690 = vst [vmem:[%s292 + $0x8] sm:$0xff] %v1684
        %1691 = vst [vmem:[%s292 + $0x10] sm:$0xff] %v1685
        %1692 = vst [vmem:[%s292 + $0x18] sm:$0xff] %v1686
        %1693 = vst [vmem:[%s292 + $0x20] sm:$0xff] %v1687
        %1694 = vst [vmem:[%s292 + $0x28] sm:$0xff] %v1688
        %s1695 = sand.u32 %s142, 1
        %s1696 = scalar_lea.sflag [#allocation4], %s1695
        %s1697 = sand.u32 %s142, 1
        %s1698 = smul.addr %s1697, 48
        %s1699 = scalar_lea.vmem [#allocation11], %s1698
        // Predicated region
        $region61: #{tpu_custom_call.1} parent=39 // pred_check
          %p1700 = pneg %p152
        $region62: #{tpu_custom_call.1} parent=39 // pred_check_branch
          %1702 = sbr.rel (%p1700) target = $region64
        $region63: #{tpu_custom_call.1} parent=39 // pred_region
          %s1704 = ssub.s32 768, 768
          %1705 = vsyncadd %s1696, %s1704
          %s1706 = smul.addr %s24, 6
          %s1707 = smul.addr %s1706, 128
          %s1708 = scalar_lea.hbm %s5, %s1707
          %s1710 = sshll.u32 %s1699, 4
          %s1711 = int_to_ptr.vmem [resolvable:$true] %s1710
          %1713 = dma.vmem_to_hbm [thread:$0]  %s1711, 768, %s1708, %s1696
        $region64: #{tpu_custom_call.1} parent=39 // pred_fallthru
          _
      $region40: #{tpu_custom_call.1} parent=5 // pred_fallthru
        _
      %p1714 = scmp.le.s32.totalorder 2, %s19
      // Predicated region
      $region65: #{tpu_custom_call.1} parent=5 // pred_check
        %p1715 = pneg %p1714
      $region66: #{tpu_custom_call.1} parent=5 // pred_check_branch
        %1717 = sbr.rel (%p1715) target = $region68
      $region67: #{tpu_custom_call.1} parent=5 // pred_region
        %s1718 = ssub.s32 %s19, 2
        // Predicated region
        $region69: #{tpu_custom_call.1} parent=67 // pred_check
          %p1719 = pneg %p158
        $region70: #{tpu_custom_call.1} parent=67 // pred_check_branch
          %1721 = sbr.rel (%p1719) target = $region72
        $region71: #{tpu_custom_call.1} parent=67 // pred_region
          %s1722 = sand.u32 %s143, 1
          %s1723 = scalar_lea.sflag [#allocation4], %s1722
          %s1724 = sand.u32 %s143, 1
          %s1725 = smul.addr %s1724, 48
          %s1726 = scalar_lea.vmem [#allocation11], %s1725
          %1727 = dma.done %s1723, 768
        $region72: #{tpu_custom_call.1} parent=67 // pred_fallthru
          _
      $region68: #{tpu_custom_call.1} parent=5 // pred_fallthru
        _
    $region6: #{tpu_custom_call.1} parent=1 // loop_footer
      %s23 = sadd.s32 1, %s19
    $region7: #{tpu_custom_call.1} parent=1 // loop_footer_branch
      %18 = sbr.rel target = $region3
    $region8: #{tpu_custom_call.1} parent=1 // loop_exit
      _
    %1728 = vsyncpa [#allocation3], 1
    %s1729 = scalar_lea.sflag [#allocation3], 1
    %1730 = vsyncpa %s1729, 1
    %1731 = vsyncpa [#allocation6], 1
    %1732 = vsyncpa [#allocation9], 1
    %1733 = vsyncpa [#allocation4], 1
    %s1734 = scalar_lea.sflag [#allocation4], 1
    %1735 = vsyncpa %s1734, 1

</llo_original>
